<compile_context>
chip_gen: v7x
topology: tpu7x:2x2x1
jax: 0.10.0
libtpu: 0.0.40
codegen_flags: <defaults>
</compile_context>

<pallas_src>
import functools
import math

import jax
import jax.numpy as jnp
from jax.experimental import pallas as pl
from jax.experimental.pallas import tpu as pltpu

LEAKY_SLOPE = 0.01   # F.leaky_relu default
LN_EPS = 1e-5        # nn.LayerNorm default


def _round_up(n, m):
    return ((n + m - 1) // m) * m


# ----------------------------------------------------------------------------
# Fused Pallas kernel: all AttnInteraction layers for one tile of rows.
# ----------------------------------------------------------------------------
def _fused_block_kernel(x_ref, *refs, num_layers):
    """refs = (W_1, gamma_1, beta_1, ..., W_L, gamma_L, beta_L, pool, out)."""
    o_ref = refs[-1]
    pool_ref = refs[-2]
    layer_refs = refs[:-2]

    h = x_ref[...].astype(jnp.float32)          # (TILE_R, F*D_in)  lane-dense
    pool = pool_ref[...]                        # (F*HD, F*HD) per-field mean matrix

    for layer in range(num_layers):             # static unroll over layers
        w_ref, g_ref, b_ref = layer_refs[3 * layer: 3 * layer + 3]

        # (V + residual) projection for every field at once: block-diag weight.
        y = jnp.dot(h, w_ref[...], preferred_element_type=jnp.float32)   # (TILE_R, F*HD)

        # leaky_relu
        y = jnp.where(y >= 0, y, LEAKY_SLOPE * y)

        # LayerNorm over each field's HD features.  Group mean / variance are
        # computed with an MXU pooling matmul so everything stays 128-lane
        # dense (no narrow cross-lane reductions or broadcasts).
        mean = jnp.dot(y, pool, preferred_element_type=jnp.float32)
        centered = y - mean
        var = jnp.dot(centered * centered, pool, preferred_element_type=jnp.float32)
        h = centered * jax.lax.rsqrt(var + LN_EPS) * g_ref[...] + b_ref[...]

    o_ref[...] = h.astype(o_ref.dtype)          # lane-dense store (F*HD wide)


# ----------------------------------------------------------------------------
# Wrapper: layout plumbing + single fused pallas_call.
# ----------------------------------------------------------------------------
def attn_interaction_block(x, params, *, tile_rows=512, out_dtype=None):
    """x: (R, F, D_in); params: list of dicts with torch-shaped weights.

    Returns (R, F, field_output_size * num_heads) in the same flattened
    (o, h) column order as the PyTorch module.
    """
    R, F, D_in = x.shape
    num_layers = len(params)
    HD = params[0]["wv"].shape[1] * params[0]["wv"].shape[2]
    out_dtype = out_dtype or x.dtype

    # Fold V-projection + residual into one weight per layer, expand block-
    # diagonally over fields, and tile gamma/beta over fields (all tiny, done
    # once in plain JAX outside the kernel).
    wide_weights, gammas, betas = [], [], []
    d_in = D_in
    eye_f = jnp.eye(F, dtype=jnp.float32)
    for p in params:
        wv_flat = p["wv"].astype(jnp.float32).reshape(d_in, HD)   # torch (o,h)-flat order
        w = wv_flat + p["wr"].astype(jnp.float32)                 # V + residual
        wide_weights.append(jnp.kron(eye_f, w))                   # (F*d_in, F*HD)
        gammas.append(jnp.tile(p["gamma"].astype(jnp.float32), F)[None, :])
        betas.append(jnp.tile(p["beta"].astype(jnp.float32), F)[None, :])
        d_in = HD

    # Per-field group-mean pooling matrix for the fused LayerNorm.
    pool = jnp.kron(eye_f, jnp.full((HD, HD), 1.0 / HD, jnp.float32))   # (F*HD, F*HD)

    # Row tiling: multiple of 8 sublanes; pad rows so the grid divides evenly.
    tile_r = min(_round_up(tile_rows, 8), _round_up(R, 8))
    r_pad = _round_up(R, tile_r)
    x_wide = x.reshape(R, F * D_in)
    if r_pad != R:
        x_wide = jnp.pad(x_wide, ((0, r_pad - R), (0, 0)))   # zero rows -> finite outputs

    in_specs = [pl.BlockSpec((tile_r, F * D_in), lambda r: (r, 0))]
    args = [x_wide]
    for w, g, b in zip(wide_weights, gammas, betas):
        in_specs += [
            pl.BlockSpec(w.shape, lambda r: (0, 0)),
            pl.BlockSpec(g.shape, lambda r: (0, 0)),
            pl.BlockSpec(b.shape, lambda r: (0, 0)),
        ]
        args += [w, g, b]
    in_specs.append(pl.BlockSpec(pool.shape, lambda r: (0, 0)))
    args.append(pool)

    kernel = functools.partial(_fused_block_kernel, num_layers=num_layers)
    out_wide = pl.pallas_call(
        kernel,
        out_shape=jax.ShapeDtypeStruct((r_pad, F * HD), out_dtype),
        grid=(r_pad // tile_r,),
        in_specs=in_specs,
        out_specs=pl.BlockSpec((tile_r, F * HD), lambda r: (r, 0)),
        compiler_params=pltpu.CompilerParams(dimension_semantics=("parallel",)),
    )(*args)

    return out_wide[:R].reshape(R, F, HD)


# ----------------------------------------------------------------------------
# Parameter init (deterministic, mirrors nn.init.kaiming_uniform_ shapes/bounds)
# ----------------------------------------------------------------------------
def _kaiming_uniform(key, shape):
    fan_in = int(math.prod(shape[1:]))                 # torch fan-in for these shapes
    bound = math.sqrt(2.0) * math.sqrt(3.0 / fan_in)   # gain(a=0, leaky_relu) = sqrt(2)
    return jax.random.uniform(key, shape, jnp.float32, minval=-bound, maxval=bound)


def make_block_params(key, field_input_size, field_output_size=8, num_layers=3, num_heads=2):
    params = []
    d_in = field_input_size
    HD = field_output_size * num_heads
    for _ in range(num_layers):
        key, k1, k2, k3, k4 = jax.random.split(key, 5)
        params.append(dict(
            wq=_kaiming_uniform(k1, (d_in, field_output_size, num_heads)),
            wk=_kaiming_uniform(k2, (d_in, field_output_size, num_heads)),
            wv=_kaiming_uniform(k3, (d_in, field_output_size, num_heads)),
            wr=_kaiming_uniform(k4, (d_in, HD)),
            gamma=jnp.ones((HD,), jnp.float32),
            beta=jnp.zeros((HD,), jnp.float32),
        ))
        d_in = HD
    return params


# ----------------------------------------------------------------------------
# Pure-JAX reference mirroring the PyTorch forward exactly (for verification).
# ----------------------------------------------------------------------------
def _reference_layer(x, p):
    qrys = jnp.einsum("rfi,ioh->rfoh", x, p["wq"])
    keys = jnp.einsum("rfi,ioh->rfoh", x, p["wk"])
    vals = jnp.einsum("rfi,ioh->rfoh", x, p["wv"])
    rsdl = jnp.einsum("rfi,ij->rfj", x, p["wr"])
    product = jnp.einsum("rdoh,rfoh->rdfh", qrys, keys)
    alpha = jax.nn.softmax(product, axis=2)
    out = jnp.einsum("rfdh,rfoh->rfoh", alpha, vals)
    R, F = x.shape[0], x.shape[1]
    out = out.reshape(R, F, -1) + rsdl
    out = jnp.where(out >= 0, out, LEAKY_SLOPE * out)
    mean = out.mean(-1, keepdims=True)
    var = ((out - mean) ** 2).mean(-1, keepdims=True)
    return (out - mean) / jnp.sqrt(var + LN_EPS) * p["gamma"] + p["beta"]


def _reference_block(x, params):
    out = x
    for p in params:
        out = _reference_layer(out, p)
    return out


# ----------------------------------------------------------------------------
if __name__ == "__main__":
    R, F = 128, 8                 # rows, fields  (F * HD = 128 -> lane-dense I/O)
    field_input_size = 32
    field_output_size = 8
    num_heads = 2
    num_layers = 3

    key = jax.random.PRNGKey(0)
    key, kx, kp = jax.random.split(key, 3)
    x = jax.random.normal(kx, (R, F, field_input_size), jnp.float32)
    params = make_block_params(kp, field_input_size, field_output_size, num_layers, num_heads)

    # tile_rows=64 -> grid of 2 row tiles (exercises the multi-step / parallel path).
    out = jax.block_until_ready(attn_interaction_block(x, params, tile_rows=64))

    ref = jax.block_until_ready(_reference_block(x, params))
    assert out.shape == (R, F, field_output_size * num_heads)
    err = float(jnp.max(jnp.abs(out - ref)))
    assert jnp.allclose(out, ref, atol=1e-4, rtol=1e-4), err

    # bf16 activation I/O path (halves HBM traffic); in-kernel math stays f32.
    out_bf16 = jax.block_until_ready(
        attn_interaction_block(x.astype(jnp.bfloat16), params, tile_rows=64))
    assert out_bf16.dtype == jnp.bfloat16
    assert bool(jnp.all(jnp.isfinite(out_bf16.astype(jnp.float32))))
    assert float(jnp.max(jnp.abs(out_bf16.astype(jnp.float32) - ref))) < 0.25

    print("KERNEL_OK")
</pallas_src>

<mosaic_0001>
module attributes {stable_mosaic.version = 11 : i64} {
  func.func @_fused_block_kernel(%arg0: i32, %arg1: memref<64x256xf32, #tpu.memory_space<vmem>>, %arg2: memref<256x128xf32, #tpu.memory_space<vmem>>, %arg3: memref<1x128xf32, #tpu.memory_space<vmem>>, %arg4: memref<1x128xf32, #tpu.memory_space<vmem>>, %arg5: memref<128x128xf32, #tpu.memory_space<vmem>>, %arg6: memref<1x128xf32, #tpu.memory_space<vmem>>, %arg7: memref<1x128xf32, #tpu.memory_space<vmem>>, %arg8: memref<128x128xf32, #tpu.memory_space<vmem>>, %arg9: memref<1x128xf32, #tpu.memory_space<vmem>>, %arg10: memref<1x128xf32, #tpu.memory_space<vmem>>, %arg11: memref<128x128xf32, #tpu.memory_space<vmem>>, %arg12: memref<64x128xf32, #tpu.memory_space<vmem>>) attributes {dimension_semantics = [#tpu.dimension_semantics<parallel>], iteration_bounds = array<i64: 2>, scalar_prefetch = 0 : i64, scratch_operands = 0 : i64, tpu.core_type = #tpu.core_type<tc>, window_params = [{transform_indices = @transform_0, window_bounds = array<i64: 64, 256>}, {pipeline_mode = #tpu.pipeline_mode<synchronous>, transform_indices = @transform_1, window_bounds = array<i64: 256, 128>}, {pipeline_mode = #tpu.pipeline_mode<synchronous>, transform_indices = @transform_2, window_bounds = array<i64: 1, 128>}, {pipeline_mode = #tpu.pipeline_mode<synchronous>, transform_indices = @transform_3, window_bounds = array<i64: 1, 128>}, {pipeline_mode = #tpu.pipeline_mode<synchronous>, transform_indices = @transform_4, window_bounds = array<i64: 128, 128>}, {pipeline_mode = #tpu.pipeline_mode<synchronous>, transform_indices = @transform_5, window_bounds = array<i64: 1, 128>}, {pipeline_mode = #tpu.pipeline_mode<synchronous>, transform_indices = @transform_6, window_bounds = array<i64: 1, 128>}, {pipeline_mode = #tpu.pipeline_mode<synchronous>, transform_indices = @transform_7, window_bounds = array<i64: 128, 128>}, {pipeline_mode = #tpu.pipeline_mode<synchronous>, transform_indices = @transform_8, window_bounds = array<i64: 1, 128>}, {pipeline_mode = #tpu.pipeline_mode<synchronous>, transform_indices = @transform_9, window_bounds = array<i64: 1, 128>}, {pipeline_mode = #tpu.pipeline_mode<synchronous>, transform_indices = @transform_10, window_bounds = array<i64: 128, 128>}, {transform_indices = @transform_11, window_bounds = array<i64: 64, 128>}]} {
    %c0 = arith.constant 0 : index
    %c0_0 = arith.constant 0 : index
    %0 = vector.load %arg1[%c0, %c0_0] : memref<64x256xf32, #tpu.memory_space<vmem>>, vector<64x256xf32>
    %c0_1 = arith.constant 0 : index
    %c0_2 = arith.constant 0 : index
    %1 = vector.load %arg11[%c0_1, %c0_2] : memref<128x128xf32, #tpu.memory_space<vmem>>, vector<128x128xf32>
    %c0_3 = arith.constant 0 : index
    %c0_4 = arith.constant 0 : index
    %2 = vector.load %arg2[%c0_3, %c0_4] : memref<256x128xf32, #tpu.memory_space<vmem>>, vector<256x128xf32>
    %cst = arith.constant dense<0.000000e+00> : vector<64x128xf32>
    %3 = tpu.matmul %0, %2, %cst {dimension_numbers = #tpu.dot_dimension_numbers<[1], [0], [0], [1], [0, 0, 1, 1], [], []>} : vector<64x256xf32>, vector<256x128xf32>, vector<64x128xf32> -> vector<64x128xf32>
    %cst_5 = arith.constant 0.000000e+00 : f32
    %4 = vector.broadcast %cst_5 : f32 to vector<64x128xf32>
    %5 = arith.cmpf oge, %3, %4 : vector<64x128xf32>
    %cst_6 = arith.constant 0.00999999977 : f32
    %6 = vector.broadcast %cst_6 : f32 to vector<64x128xf32>
    %7 = arith.mulf %6, %3 : vector<64x128xf32>
    %8 = arith.select %5, %3, %7 : vector<64x128xi1>, vector<64x128xf32>
    %cst_7 = arith.constant dense<0.000000e+00> : vector<64x128xf32>
    %9 = tpu.matmul %8, %1, %cst_7 {dimension_numbers = #tpu.dot_dimension_numbers<[1], [0], [0], [1], [0, 0, 1, 1], [], []>} : vector<64x128xf32>, vector<128x128xf32>, vector<64x128xf32> -> vector<64x128xf32>
    %10 = arith.subf %8, %9 : vector<64x128xf32>
    %11 = arith.mulf %10, %10 : vector<64x128xf32>
    %cst_8 = arith.constant dense<0.000000e+00> : vector<64x128xf32>
    %12 = tpu.matmul %11, %1, %cst_8 {dimension_numbers = #tpu.dot_dimension_numbers<[1], [0], [0], [1], [0, 0, 1, 1], [], []>} : vector<64x128xf32>, vector<128x128xf32>, vector<64x128xf32> -> vector<64x128xf32>
    %cst_9 = arith.constant 9.99999974E-6 : f32
    %13 = vector.broadcast %cst_9 : f32 to vector<64x128xf32>
    %14 = arith.addf %12, %13 : vector<64x128xf32>
    %15 = math.rsqrt %14 : vector<64x128xf32>
    %16 = arith.mulf %10, %15 : vector<64x128xf32>
    %c0_10 = arith.constant 0 : index
    %c0_11 = arith.constant 0 : index
    %17 = vector.load %arg3[%c0_10, %c0_11] : memref<1x128xf32, #tpu.memory_space<vmem>>, vector<1x128xf32>
    %18 = vector.broadcast %17 : vector<1x128xf32> to vector<64x128xf32>
    %19 = arith.mulf %16, %18 : vector<64x128xf32>
    %c0_12 = arith.constant 0 : index
    %c0_13 = arith.constant 0 : index
    %20 = vector.load %arg4[%c0_12, %c0_13] : memref<1x128xf32, #tpu.memory_space<vmem>>, vector<1x128xf32>
    %21 = vector.broadcast %20 : vector<1x128xf32> to vector<64x128xf32>
    %22 = arith.addf %19, %21 : vector<64x128xf32>
    %c0_14 = arith.constant 0 : index
    %c0_15 = arith.constant 0 : index
    %23 = vector.load %arg5[%c0_14, %c0_15] : memref<128x128xf32, #tpu.memory_space<vmem>>, vector<128x128xf32>
    %cst_16 = arith.constant dense<0.000000e+00> : vector<64x128xf32>
    %24 = tpu.matmul %22, %23, %cst_16 {dimension_numbers = #tpu.dot_dimension_numbers<[1], [0], [0], [1], [0, 0, 1, 1], [], []>} : vector<64x128xf32>, vector<128x128xf32>, vector<64x128xf32> -> vector<64x128xf32>
    %cst_17 = arith.constant 0.000000e+00 : f32
    %25 = vector.broadcast %cst_17 : f32 to vector<64x128xf32>
    %26 = arith.cmpf oge, %24, %25 : vector<64x128xf32>
    %cst_18 = arith.constant 0.00999999977 : f32
    %27 = vector.broadcast %cst_18 : f32 to vector<64x128xf32>
    %28 = arith.mulf %27, %24 : vector<64x128xf32>
    %29 = arith.select %26, %24, %28 : vector<64x128xi1>, vector<64x128xf32>
    %cst_19 = arith.constant dense<0.000000e+00> : vector<64x128xf32>
    %30 = tpu.matmul %29, %1, %cst_19 {dimension_numbers = #tpu.dot_dimension_numbers<[1], [0], [0], [1], [0, 0, 1, 1], [], []>} : vector<64x128xf32>, vector<128x128xf32>, vector<64x128xf32> -> vector<64x128xf32>
    %31 = arith.subf %29, %30 : vector<64x128xf32>
    %32 = arith.mulf %31, %31 : vector<64x128xf32>
    %cst_20 = arith.constant dense<0.000000e+00> : vector<64x128xf32>
    %33 = tpu.matmul %32, %1, %cst_20 {dimension_numbers = #tpu.dot_dimension_numbers<[1], [0], [0], [1], [0, 0, 1, 1], [], []>} : vector<64x128xf32>, vector<128x128xf32>, vector<64x128xf32> -> vector<64x128xf32>
    %cst_21 = arith.constant 9.99999974E-6 : f32
    %34 = vector.broadcast %cst_21 : f32 to vector<64x128xf32>
    %35 = arith.addf %33, %34 : vector<64x128xf32>
    %36 = math.rsqrt %35 : vector<64x128xf32>
    %37 = arith.mulf %31, %36 : vector<64x128xf32>
    %c0_22 = arith.constant 0 : index
    %c0_23 = arith.constant 0 : index
    %38 = vector.load %arg6[%c0_22, %c0_23] : memref<1x128xf32, #tpu.memory_space<vmem>>, vector<1x128xf32>
    %39 = vector.broadcast %38 : vector<1x128xf32> to vector<64x128xf32>
    %40 = arith.mulf %37, %39 : vector<64x128xf32>
    %c0_24 = arith.constant 0 : index
    %c0_25 = arith.constant 0 : index
    %41 = vector.load %arg7[%c0_24, %c0_25] : memref<1x128xf32, #tpu.memory_space<vmem>>, vector<1x128xf32>
    %42 = vector.broadcast %41 : vector<1x128xf32> to vector<64x128xf32>
    %43 = arith.addf %40, %42 : vector<64x128xf32>
    %c0_26 = arith.constant 0 : index
    %c0_27 = arith.constant 0 : index
    %44 = vector.load %arg8[%c0_26, %c0_27] : memref<128x128xf32, #tpu.memory_space<vmem>>, vector<128x128xf32>
    %cst_28 = arith.constant dense<0.000000e+00> : vector<64x128xf32>
    %45 = tpu.matmul %43, %44, %cst_28 {dimension_numbers = #tpu.dot_dimension_numbers<[1], [0], [0], [1], [0, 0, 1, 1], [], []>} : vector<64x128xf32>, vector<128x128xf32>, vector<64x128xf32> -> vector<64x128xf32>
    %cst_29 = arith.constant 0.000000e+00 : f32
    %46 = vector.broadcast %cst_29 : f32 to vector<64x128xf32>
    %47 = arith.cmpf oge, %45, %46 : vector<64x128xf32>
    %cst_30 = arith.constant 0.00999999977 : f32
    %48 = vector.broadcast %cst_30 : f32 to vector<64x128xf32>
    %49 = arith.mulf %48, %45 : vector<64x128xf32>
    %50 = arith.select %47, %45, %49 : vector<64x128xi1>, vector<64x128xf32>
    %cst_31 = arith.constant dense<0.000000e+00> : vector<64x128xf32>
    %51 = tpu.matmul %50, %1, %cst_31 {dimension_numbers = #tpu.dot_dimension_numbers<[1], [0], [0], [1], [0, 0, 1, 1], [], []>} : vector<64x128xf32>, vector<128x128xf32>, vector<64x128xf32> -> vector<64x128xf32>
    %52 = arith.subf %50, %51 : vector<64x128xf32>
    %53 = arith.mulf %52, %52 : vector<64x128xf32>
    %cst_32 = arith.constant dense<0.000000e+00> : vector<64x128xf32>
    %54 = tpu.matmul %53, %1, %cst_32 {dimension_numbers = #tpu.dot_dimension_numbers<[1], [0], [0], [1], [0, 0, 1, 1], [], []>} : vector<64x128xf32>, vector<128x128xf32>, vector<64x128xf32> -> vector<64x128xf32>
    %cst_33 = arith.constant 9.99999974E-6 : f32
    %55 = vector.broadcast %cst_33 : f32 to vector<64x128xf32>
    %56 = arith.addf %54, %55 : vector<64x128xf32>
    %57 = math.rsqrt %56 : vector<64x128xf32>
    %58 = arith.mulf %52, %57 : vector<64x128xf32>
    %c0_34 = arith.constant 0 : index
    %c0_35 = arith.constant 0 : index
    %59 = vector.load %arg9[%c0_34, %c0_35] : memref<1x128xf32, #tpu.memory_space<vmem>>, vector<1x128xf32>
    %60 = vector.broadcast %59 : vector<1x128xf32> to vector<64x128xf32>
    %61 = arith.mulf %58, %60 : vector<64x128xf32>
    %c0_36 = arith.constant 0 : index
    %c0_37 = arith.constant 0 : index
    %62 = vector.load %arg10[%c0_36, %c0_37] : memref<1x128xf32, #tpu.memory_space<vmem>>, vector<1x128xf32>
    %63 = vector.broadcast %62 : vector<1x128xf32> to vector<64x128xf32>
    %64 = arith.addf %61, %63 : vector<64x128xf32>
    %c0_38 = arith.constant 0 : index
    %c0_39 = arith.constant 0 : index
    %65 = vector.load %arg12[%c0_38, %c0_39] : memref<64x128xf32, #tpu.memory_space<vmem>>, vector<64x128xf32>
    tpu.vector_store %arg12[%c0_38, %c0_39], %64 {strides = array<i32>} : memref<64x128xf32, #tpu.memory_space<vmem>>, vector<64x128xf32>,
    return
  }
  func.func @transform_0(%arg0: i32) -> (i32, i32) {
    %c0_i32 = arith.constant 0 : i32
    %c0_i32_0 = arith.constant 0 : i32
    return %arg0, %c0_i32 : i32, i32
  }
  func.func @transform_1(%arg0: i32) -> (i32, i32) {
    %c0_i32 = arith.constant 0 : i32
    %c0_i32_0 = arith.constant 0 : i32
    %c0_i32_1 = arith.constant 0 : i32
    return %c0_i32, %c0_i32_0 : i32, i32
  }
  func.func @transform_2(%arg0: i32) -> (i32, i32) {
    %c0_i32 = arith.constant 0 : i32
    %c0_i32_0 = arith.constant 0 : i32
    %c0_i32_1 = arith.constant 0 : i32
    return %c0_i32, %c0_i32_0 : i32, i32
  }
  func.func @transform_3(%arg0: i32) -> (i32, i32) {
    %c0_i32 = arith.constant 0 : i32
    %c0_i32_0 = arith.constant 0 : i32
    %c0_i32_1 = arith.constant 0 : i32
    return %c0_i32, %c0_i32_0 : i32, i32
  }
  func.func @transform_4(%arg0: i32) -> (i32, i32) {
    %c0_i32 = arith.constant 0 : i32
    %c0_i32_0 = arith.constant 0 : i32
    %c0_i32_1 = arith.constant 0 : i32
    return %c0_i32, %c0_i32_0 : i32, i32
  }
  func.func @transform_5(%arg0: i32) -> (i32, i32) {
    %c0_i32 = arith.constant 0 : i32
    %c0_i32_0 = arith.constant 0 : i32
    %c0_i32_1 = arith.constant 0 : i32
    return %c0_i32, %c0_i32_0 : i32, i32
  }
  func.func @transform_6(%arg0: i32) -> (i32, i32) {
    %c0_i32 = arith.constant 0 : i32
    %c0_i32_0 = arith.constant 0 : i32
    %c0_i32_1 = arith.constant 0 : i32
    return %c0_i32, %c0_i32_0 : i32, i32
  }
  func.func @transform_7(%arg0: i32) -> (i32, i32) {
    %c0_i32 = arith.constant 0 : i32
    %c0_i32_0 = arith.constant 0 : i32
    %c0_i32_1 = arith.constant 0 : i32
    return %c0_i32, %c0_i32_0 : i32, i32
  }
  func.func @transform_8(%arg0: i32) -> (i32, i32) {
    %c0_i32 = arith.constant 0 : i32
    %c0_i32_0 = arith.constant 0 : i32
    %c0_i32_1 = arith.constant 0 : i32
    return %c0_i32, %c0_i32_0 : i32, i32
  }
  func.func @transform_9(%arg0: i32) -> (i32, i32) {
    %c0_i32 = arith.constant 0 : i32
    %c0_i32_0 = arith.constant 0 : i32
    %c0_i32_1 = arith.constant 0 : i32
    return %c0_i32, %c0_i32_0 : i32, i32
  }
  func.func @transform_10(%arg0: i32) -> (i32, i32) {
    %c0_i32 = arith.constant 0 : i32
    %c0_i32_0 = arith.constant 0 : i32
    %c0_i32_1 = arith.constant 0 : i32
    return %c0_i32, %c0_i32_0 : i32, i32
  }
  func.func @transform_11(%arg0: i32) -> (i32, i32) {
    %c0_i32 = arith.constant 0 : i32
    %c0_i32_0 = arith.constant 0 : i32
    return %arg0, %c0_i32 : i32, i32
  }
}

</mosaic_0001>

<llo_original>
// kernel: tpu_custom_call.1
$region0: #{tpu_custom_call.1}
  #allocation0 [shape = 'u32[]', space=smem, size = 0x4, offset = 0x4, fixed_abs, tag = 'smem constant byte address 0x4 - core index']
  #allocation1 [shape = 'u32[144,128]{1,0:T(1,128)}', space=vmem, size = 0x12000, scoped, tag = 'internal scratch']
  %s0 = inlined_call_operand.hbm [shape: f32[128,256], index: 0, kind: input, shape index: {}]
  %s1 = inlined_call_operand.hbm [shape: f32[256,128], index: 1, kind: input, shape index: {}]
  %s2 = inlined_call_operand.vmem [shape: f32[1,128], index: 2, kind: input, shape index: {}]
  %s3 = inlined_call_operand.vmem [shape: f32[1,128], index: 3, kind: input, shape index: {}]
  %s4 = inlined_call_operand.hbm [shape: f32[128,128], index: 4, kind: input, shape index: {}]
  %s5 = inlined_call_operand.vmem [shape: f32[1,128], index: 5, kind: input, shape index: {}]
  %s6 = inlined_call_operand.vmem [shape: f32[1,128], index: 6, kind: input, shape index: {}]
  %s7 = inlined_call_operand.hbm [shape: f32[128,128], index: 7, kind: input, shape index: {}]
  %s8 = inlined_call_operand.vmem [shape: f32[1,128], index: 8, kind: input, shape index: {}]
  %s9 = inlined_call_operand.vmem [shape: f32[1,128], index: 9, kind: input, shape index: {}]
  %s10 = inlined_call_operand.hbm [shape: f32[128,128], index: 10, kind: input, shape index: {}]
  %s11 = inlined_call_operand.hbm [shape: f32[128,128], index: 11, kind: output, shape index: {}]
  %s12 = sld [smem:[#allocation0]]
  $region97: #{tpu_custom_call.1} parent=0
    _
  %s14 = ssub.s32 1, %s12
  %s15 = scalar_select 0, %s14, %s12
  $region1: #{tpu_custom_call.1} parent=0
    #allocation2 [shape = 'u8[131072]{0}', space=vmem, size = 0x20000, scoped, tag = 'input window, operand 0']
    #allocation3 [shape = 's32[2]{0}', space=sflag, size = 0x8, scoped, tag = 'scoped memory for tpu_custom_call.1']
    #allocation4 [shape = 's32[2]{0}', space=sflag, size = 0x8, scoped, tag = 'scoped memory for tpu_custom_call.1']
    #allocation5 [shape = 'u8[131072]{0}', space=vmem, size = 0x20000, scoped, tag = 'input window, operand 1, single buffered']
    #allocation6 [shape = 's32[1]{0}', space=sflag, size = 0x4, scoped, tag = 'scoped memory for tpu_custom_call.1']
    #allocation7 [shape = 'u8[65536]{0}', space=vmem, size = 0x10000, scoped, tag = 'input window, operand 4, single buffered']
    #allocation8 [shape = 'u8[65536]{0}', space=vmem, size = 0x10000, scoped, tag = 'input window, operand 7, single buffered']
    #allocation9 [shape = 's32[1]{0}', space=sflag, size = 0x4, scoped, tag = 'scoped memory for tpu_custom_call.1']
    #allocation10 [shape = 'u8[65536]{0}', space=vmem, size = 0x10000, scoped, tag = 'input window, operand 10, single buffered']
    #allocation11 [shape = 'u8[65536]{0}', space=vmem, size = 0x10000, scoped, tag = 'output window, operand 0']
    %16 = vsyncpa [#allocation3], 0
    %s17 = scalar_lea.sflag [#allocation3], 1
    %18 = vsyncpa %s17, 0
    %19 = vsyncpa [#allocation6], 0
    %20 = vsyncpa [#allocation9], 0
    %21 = vsyncpa [#allocation4], 0
    %s22 = scalar_lea.sflag [#allocation4], 1
    %23 = vsyncpa %s22, 0
    loop: start=0, step=1, limit=4
    $region2: #{tpu_custom_call.1} parent=1 // loop_pre_header
      _
    $region3: #{tpu_custom_call.1} parent=1 // loop_header
      %s25 = sphi 0, %s29
      %p26 = scmp.ge.s32.totalorder %s25, 4
      %s35 = sphi 0, %s37
      %s38 = sphi 0, %s35
      %s39 = sphi 0, %s38
      %s55 = sphi 0, %s39
      %s59 = sphi 0, %s59
      %s61 = sphi 0, %s59
      %s62 = sphi 0, %s61
      %s76 = sphi 0, %s62
      %s80 = sphi 0, %s80
      %s82 = sphi 0, %s80
      %s83 = sphi 0, %s82
      %s97 = sphi 0, %s83
      %s101 = sphi 0, %s101
      %s103 = sphi 0, %s101
      %s104 = sphi 0, %s103
      %s118 = sphi 0, %s104
      %s122 = sphi 0, %s122
      %s124 = sphi 0, %s122
      %s125 = sphi 0, %s124
      %s139 = sphi 0, %s125
      %s143 = sphi 0, %s143
      %s145 = sphi 0, %s143
      %s146 = sphi 0, %s145
      %s160 = sphi 0, %s146
      %s164 = sphi 0, %s164
      %s166 = sphi 0, %s164
      %s167 = sphi 0, %s166
      %s181 = sphi 0, %s167
      %s185 = sphi 0, %s185
      %s187 = sphi 0, %s185
      %s188 = sphi 0, %s187
      %s202 = sphi 0, %s188
      %s206 = sphi 0, %s206
      %s208 = sphi 0, %s206
      %s209 = sphi 0, %s208
      %s223 = sphi 0, %s209
      %s227 = sphi 0, %s227
      %s229 = sphi 0, %s227
      %s230 = sphi 0, %s229
      %s244 = sphi 0, %s230
      %s248 = sphi 0, %s248
      %s250 = sphi 0, %s248
      %s251 = sphi 0, %s250
      %s265 = sphi 0, %s251
      %s271 = sphi 0, %s273
      %s274 = sphi 0, %s271
      %s275 = sphi 0, %s274
      %s291 = sphi 0, %s275
    $region4: #{tpu_custom_call.1} parent=1 // loop_header_branch
      %28 = sbr.rel (%p26) target = $region8
    $region5: #{tpu_custom_call.1} parent=1 // loop_body
      %s30 = ssub.s32 %s25, 1
      %s31 = ssub.s32 %s25, 2
      %s32 = sadd.s32 %s25, 1
      %s33 = ssub.s32 %s25, %s32
      %p34 = scmp.eq.s32.totalorder %s33, 0
      %s36 = sadd.s32 %s35, 1
      %s37 = scalar_select %p34, %s35, %s36
      %p40 = pneg %p34
      %p41 = scmp.eq.s32.totalorder %s25, 1
      %p42 = por %p40, %p41
      %p43 = scmp.ne.s32.totalorder %s35, %s38
      %p44 = scmp.eq.s32.totalorder %s25, 0
      %p45 = por %p43, %p44
      %p46 = scmp.ne.s32.totalorder %s35, %s38
      %p47 = scmp.eq.s32.totalorder %s30, 1
      %p48 = por %p46, %p47
      %p49 = scmp.ne.s32.totalorder %s38, %s39
      %p50 = scmp.eq.s32.totalorder %s30, 0
      %p51 = por %p49, %p50
      %p52 = scmp.ne.s32.totalorder %s38, %s39
      %p53 = scmp.eq.s32.totalorder %s31, 1
      %p54 = por %p52, %p53
      %p56 = scmp.ne.s32.totalorder %s39, %s55
      %p57 = scmp.eq.s32.totalorder %s31, 0
      %p58 = por %p56, %p57
      %s60 = sadd.s32 %s59, 1
      %p63 = scmp.eq.s32.totalorder %s25, 1
      %p64 = scmp.ne.s32.totalorder %s59, %s61
      %p65 = scmp.eq.s32.totalorder %s25, 0
      %p66 = por %p64, %p65
      %p67 = scmp.ne.s32.totalorder %s59, %s61
      %p68 = scmp.eq.s32.totalorder %s30, 1
      %p69 = por %p67, %p68
      %p70 = scmp.ne.s32.totalorder %s61, %s62
      %p71 = scmp.eq.s32.totalorder %s30, 0
      %p72 = por %p70, %p71
      %p73 = scmp.ne.s32.totalorder %s61, %s62
      %p74 = scmp.eq.s32.totalorder %s31, 1
      %p75 = por %p73, %p74
      %p77 = scmp.ne.s32.totalorder %s62, %s76
      %p78 = scmp.eq.s32.totalorder %s31, 0
      %p79 = por %p77, %p78
      %s81 = sadd.s32 %s80, 1
      %p84 = scmp.eq.s32.totalorder %s25, 1
      %p85 = scmp.ne.s32.totalorder %s80, %s82
      %p86 = scmp.eq.s32.totalorder %s25, 0
      %p87 = por %p85, %p86
      %p88 = scmp.ne.s32.totalorder %s80, %s82
      %p89 = scmp.eq.s32.totalorder %s30, 1
      %p90 = por %p88, %p89
      %p91 = scmp.ne.s32.totalorder %s82, %s83
      %p92 = scmp.eq.s32.totalorder %s30, 0
      %p93 = por %p91, %p92
      %p94 = scmp.ne.s32.totalorder %s82, %s83
      %p95 = scmp.eq.s32.totalorder %s31, 1
      %p96 = por %p94, %p95
      %p98 = scmp.ne.s32.totalorder %s83, %s97
      %p99 = scmp.eq.s32.totalorder %s31, 0
      %p100 = por %p98, %p99
      %s102 = sadd.s32 %s101, 1
      %p105 = scmp.eq.s32.totalorder %s25, 1
      %p106 = scmp.ne.s32.totalorder %s101, %s103
      %p107 = scmp.eq.s32.totalorder %s25, 0
      %p108 = por %p106, %p107
      %p109 = scmp.ne.s32.totalorder %s101, %s103
      %p110 = scmp.eq.s32.totalorder %s30, 1
      %p111 = por %p109, %p110
      %p112 = scmp.ne.s32.totalorder %s103, %s104
      %p113 = scmp.eq.s32.totalorder %s30, 0
      %p114 = por %p112, %p113
      %p115 = scmp.ne.s32.totalorder %s103, %s104
      %p116 = scmp.eq.s32.totalorder %s31, 1
      %p117 = por %p115, %p116
      %p119 = scmp.ne.s32.totalorder %s104, %s118
      %p120 = scmp.eq.s32.totalorder %s31, 0
      %p121 = por %p119, %p120
      %s123 = sadd.s32 %s122, 1
      %p126 = scmp.eq.s32.totalorder %s25, 1
      %p127 = scmp.ne.s32.totalorder %s122, %s124
      %p128 = scmp.eq.s32.totalorder %s25, 0
      %p129 = por %p127, %p128
      %p130 = scmp.ne.s32.totalorder %s122, %s124
      %p131 = scmp.eq.s32.totalorder %s30, 1
      %p132 = por %p130, %p131
      %p133 = scmp.ne.s32.totalorder %s124, %s125
      %p134 = scmp.eq.s32.totalorder %s30, 0
      %p135 = por %p133, %p134
      %p136 = scmp.ne.s32.totalorder %s124, %s125
      %p137 = scmp.eq.s32.totalorder %s31, 1
      %p138 = por %p136, %p137
      %p140 = scmp.ne.s32.totalorder %s125, %s139
      %p141 = scmp.eq.s32.totalorder %s31, 0
      %p142 = por %p140, %p141
      %s144 = sadd.s32 %s143, 1
      %p147 = scmp.eq.s32.totalorder %s25, 1
      %p148 = scmp.ne.s32.totalorder %s143, %s145
      %p149 = scmp.eq.s32.totalorder %s25, 0
      %p150 = por %p148, %p149
      %p151 = scmp.ne.s32.totalorder %s143, %s145
      %p152 = scmp.eq.s32.totalorder %s30, 1
      %p153 = por %p151, %p152
      %p154 = scmp.ne.s32.totalorder %s145, %s146
      %p155 = scmp.eq.s32.totalorder %s30, 0
      %p156 = por %p154, %p155
      %p157 = scmp.ne.s32.totalorder %s145, %s146
      %p158 = scmp.eq.s32.totalorder %s31, 1
      %p159 = por %p157, %p158
      %p161 = scmp.ne.s32.totalorder %s146, %s160
      %p162 = scmp.eq.s32.totalorder %s31, 0
      %p163 = por %p161, %p162
      %s165 = sadd.s32 %s164, 1
      %p168 = scmp.eq.s32.totalorder %s25, 1
      %p169 = scmp.ne.s32.totalorder %s164, %s166
      %p170 = scmp.eq.s32.totalorder %s25, 0
      %p171 = por %p169, %p170
      %p172 = scmp.ne.s32.totalorder %s164, %s166
      %p173 = scmp.eq.s32.totalorder %s30, 1
      %p174 = por %p172, %p173
      %p175 = scmp.ne.s32.totalorder %s166, %s167
      %p176 = scmp.eq.s32.totalorder %s30, 0
      %p177 = por %p175, %p176
      %p178 = scmp.ne.s32.totalorder %s166, %s167
      %p179 = scmp.eq.s32.totalorder %s31, 1
      %p180 = por %p178, %p179
      %p182 = scmp.ne.s32.totalorder %s167, %s181
      %p183 = scmp.eq.s32.totalorder %s31, 0
      %p184 = por %p182, %p183
      %s186 = sadd.s32 %s185, 1
      %p189 = scmp.eq.s32.totalorder %s25, 1
      %p190 = scmp.ne.s32.totalorder %s185, %s187
      %p191 = scmp.eq.s32.totalorder %s25, 0
      %p192 = por %p190, %p191
      %p193 = scmp.ne.s32.totalorder %s185, %s187
      %p194 = scmp.eq.s32.totalorder %s30, 1
      %p195 = por %p193, %p194
      %p196 = scmp.ne.s32.totalorder %s187, %s188
      %p197 = scmp.eq.s32.totalorder %s30, 0
      %p198 = por %p196, %p197
      %p199 = scmp.ne.s32.totalorder %s187, %s188
      %p200 = scmp.eq.s32.totalorder %s31, 1
      %p201 = por %p199, %p200
      %p203 = scmp.ne.s32.totalorder %s188, %s202
      %p204 = scmp.eq.s32.totalorder %s31, 0
      %p205 = por %p203, %p204
      %s207 = sadd.s32 %s206, 1
      %p210 = scmp.eq.s32.totalorder %s25, 1
      %p211 = scmp.ne.s32.totalorder %s206, %s208
      %p212 = scmp.eq.s32.totalorder %s25, 0
      %p213 = por %p211, %p212
      %p214 = scmp.ne.s32.totalorder %s206, %s208
      %p215 = scmp.eq.s32.totalorder %s30, 1
      %p216 = por %p214, %p215
      %p217 = scmp.ne.s32.totalorder %s208, %s209
      %p218 = scmp.eq.s32.totalorder %s30, 0
      %p219 = por %p217, %p218
      %p220 = scmp.ne.s32.totalorder %s208, %s209
      %p221 = scmp.eq.s32.totalorder %s31, 1
      %p222 = por %p220, %p221
      %p224 = scmp.ne.s32.totalorder %s209, %s223
      %p225 = scmp.eq.s32.totalorder %s31, 0
      %p226 = por %p224, %p225
      %s228 = sadd.s32 %s227, 1
      %p231 = scmp.eq.s32.totalorder %s25, 1
      %p232 = scmp.ne.s32.totalorder %s227, %s229
      %p233 = scmp.eq.s32.totalorder %s25, 0
      %p234 = por %p232, %p233
      %p235 = scmp.ne.s32.totalorder %s227, %s229
      %p236 = scmp.eq.s32.totalorder %s30, 1
      %p237 = por %p235, %p236
      %p238 = scmp.ne.s32.totalorder %s229, %s230
      %p239 = scmp.eq.s32.totalorder %s30, 0
      %p240 = por %p238, %p239
      %p241 = scmp.ne.s32.totalorder %s229, %s230
      %p242 = scmp.eq.s32.totalorder %s31, 1
      %p243 = por %p241, %p242
      %p245 = scmp.ne.s32.totalorder %s230, %s244
      %p246 = scmp.eq.s32.totalorder %s31, 0
      %p247 = por %p245, %p246
      %s249 = sadd.s32 %s248, 1
      %p252 = scmp.eq.s32.totalorder %s25, 1
      %p253 = scmp.ne.s32.totalorder %s248, %s250
      %p254 = scmp.eq.s32.totalorder %s25, 0
      %p255 = por %p253, %p254
      %p256 = scmp.ne.s32.totalorder %s248, %s250
      %p257 = scmp.eq.s32.totalorder %s30, 1
      %p258 = por %p256, %p257
      %p259 = scmp.ne.s32.totalorder %s250, %s251
      %p260 = scmp.eq.s32.totalorder %s30, 0
      %p261 = por %p259, %p260
      %p262 = scmp.ne.s32.totalorder %s250, %s251
      %p263 = scmp.eq.s32.totalorder %s31, 1
      %p264 = por %p262, %p263
      %p266 = scmp.ne.s32.totalorder %s251, %s265
      %p267 = scmp.eq.s32.totalorder %s31, 0
      %p268 = por %p266, %p267
      %s269 = ssub.s32 %s25, %s32
      %p270 = scmp.eq.s32.totalorder %s269, 0
      %s272 = sadd.s32 %s271, 1
      %s273 = scalar_select %p270, %s271, %s272
      %p276 = pneg %p270
      %p277 = scmp.eq.s32.totalorder %s25, 1
      %p278 = por %p276, %p277
      %p279 = scmp.ne.s32.totalorder %s271, %s274
      %p280 = scmp.eq.s32.totalorder %s25, 0
      %p281 = por %p279, %p280
      %p282 = scmp.ne.s32.totalorder %s271, %s274
      %p283 = scmp.eq.s32.totalorder %s30, 1
      %p284 = por %p282, %p283
      %p285 = scmp.ne.s32.totalorder %s274, %s275
      %p286 = scmp.eq.s32.totalorder %s30, 0
      %p287 = por %p285, %p286
      %p288 = scmp.ne.s32.totalorder %s274, %s275
      %p289 = scmp.eq.s32.totalorder %s31, 1
      %p290 = por %p288, %p289
      %p292 = scmp.ne.s32.totalorder %s275, %s291
      %p293 = scmp.eq.s32.totalorder %s31, 0
      %p294 = por %p292, %p293
      %p295 = scmp.le.s32.totalorder 1, %s25
      %p296 = scmp.lt.s32.totalorder %s25, 3
      %p297 = pnand %p295, %p296
      %p298 = pneg %p297
      // Predicated region
      $region9: #{tpu_custom_call.1} parent=5 // pred_check
        _
      $region10: #{tpu_custom_call.1} parent=5 // pred_check_branch
        %300 = sbr.rel (%p297) target = $region12
      $region11: #{tpu_custom_call.1} parent=5 // pred_region
        %s301 = ssub.s32 %s25, 1
        // Predicated region
        $region13: #{tpu_custom_call.1} parent=11 // pred_check
          %p302 = pneg %p72
        $region14: #{tpu_custom_call.1} parent=11 // pred_check_branch
          %304 = sbr.rel (%p302) target = $region16
        $region15: #{tpu_custom_call.1} parent=11 // pred_region
          %s306 = ssub.s32 4096, 4096
          %307 = vsyncadd [#allocation6], %s306
          %s308 = sshll.u32 [#allocation5], 4
          %s309 = int_to_ptr.vmem [resolvable:$true] %s308
          %314 = dma.hbm_to_vmem [thread:$0]  %s1, 4096, %s309, [#allocation6], 128, 128, 8
        $region16: #{tpu_custom_call.1} parent=11 // pred_fallthru
          _
        // Predicated region
        $region17: #{tpu_custom_call.1} parent=11 // pred_check
          %p315 = pneg %p93
        $region18: #{tpu_custom_call.1} parent=11 // pred_check_branch
          %317 = sbr.rel (%p315) target = $region20
        $region19: #{tpu_custom_call.1} parent=11 // pred_region
          _
        $region20: #{tpu_custom_call.1} parent=11 // pred_fallthru
          _
        // Predicated region
        $region21: #{tpu_custom_call.1} parent=11 // pred_check
          %p318 = pneg %p114
        $region22: #{tpu_custom_call.1} parent=11 // pred_check_branch
          %320 = sbr.rel (%p318) target = $region24
        $region23: #{tpu_custom_call.1} parent=11 // pred_region
          _
        $region24: #{tpu_custom_call.1} parent=11 // pred_fallthru
          _
        // Predicated region
        $region25: #{tpu_custom_call.1} parent=11 // pred_check
          %p321 = pneg %p135
        $region26: #{tpu_custom_call.1} parent=11 // pred_check_branch
          %323 = sbr.rel (%p321) target = $region28
        $region27: #{tpu_custom_call.1} parent=11 // pred_region
          %s325 = ssub.s32 2048, 2048
          %326 = vsyncadd [#allocation6], %s325
          %s327 = sshll.u32 [#allocation7], 4
          %s328 = int_to_ptr.vmem [resolvable:$true] %s327
          %333 = dma.hbm_to_vmem [thread:$0]  %s4, 2048, %s328, [#allocation6], 128, 128, 8
        $region28: #{tpu_custom_call.1} parent=11 // pred_fallthru
          _
        // Predicated region
        $region29: #{tpu_custom_call.1} parent=11 // pred_check
          %p334 = pneg %p156
        $region30: #{tpu_custom_call.1} parent=11 // pred_check_branch
          %336 = sbr.rel (%p334) target = $region32
        $region31: #{tpu_custom_call.1} parent=11 // pred_region
          _
        $region32: #{tpu_custom_call.1} parent=11 // pred_fallthru
          _
        // Predicated region
        $region33: #{tpu_custom_call.1} parent=11 // pred_check
          %p337 = pneg %p177
        $region34: #{tpu_custom_call.1} parent=11 // pred_check_branch
          %339 = sbr.rel (%p337) target = $region36
        $region35: #{tpu_custom_call.1} parent=11 // pred_region
          _
        $region36: #{tpu_custom_call.1} parent=11 // pred_fallthru
          _
        // Predicated region
        $region37: #{tpu_custom_call.1} parent=11 // pred_check
          %p340 = pneg %p198
        $region38: #{tpu_custom_call.1} parent=11 // pred_check_branch
          %342 = sbr.rel (%p340) target = $region40
        $region39: #{tpu_custom_call.1} parent=11 // pred_region
          %s344 = ssub.s32 2048, 2048
          %345 = vsyncadd [#allocation9], %s344
          %s346 = sshll.u32 [#allocation8], 4
          %s347 = int_to_ptr.vmem [resolvable:$true] %s346
          %352 = dma.hbm_to_vmem [thread:$0]  %s7, 2048, %s347, [#allocation9], 128, 128, 8
        $region40: #{tpu_custom_call.1} parent=11 // pred_fallthru
          _
        // Predicated region
        $region41: #{tpu_custom_call.1} parent=11 // pred_check
          %p353 = pneg %p219
        $region42: #{tpu_custom_call.1} parent=11 // pred_check_branch
          %355 = sbr.rel (%p353) target = $region44
        $region43: #{tpu_custom_call.1} parent=11 // pred_region
          _
        $region44: #{tpu_custom_call.1} parent=11 // pred_fallthru
          _
        // Predicated region
        $region45: #{tpu_custom_call.1} parent=11 // pred_check
          %p356 = pneg %p240
        $region46: #{tpu_custom_call.1} parent=11 // pred_check_branch
          %358 = sbr.rel (%p356) target = $region48
        $region47: #{tpu_custom_call.1} parent=11 // pred_region
          _
        $region48: #{tpu_custom_call.1} parent=11 // pred_fallthru
          _
        // Predicated region
        $region49: #{tpu_custom_call.1} parent=11 // pred_check
          %p359 = pneg %p261
        $region50: #{tpu_custom_call.1} parent=11 // pred_check_branch
          %361 = sbr.rel (%p359) target = $region52
        $region51: #{tpu_custom_call.1} parent=11 // pred_region
          %s363 = ssub.s32 2048, 2048
          %364 = vsyncadd [#allocation9], %s363
          %s365 = sshll.u32 [#allocation10], 4
          %s366 = int_to_ptr.vmem [resolvable:$true] %s365
          %371 = dma.hbm_to_vmem [thread:$0]  %s10, 2048, %s366, [#allocation9], 128, 128, 8
        $region52: #{tpu_custom_call.1} parent=11 // pred_fallthru
          _
      $region12: #{tpu_custom_call.1} parent=5 // pred_fallthru
        _
      %p372 = scmp.lt.s32.totalorder %s25, 2
      // Predicated region
      $region53: #{tpu_custom_call.1} parent=5 // pred_check
        %p373 = pneg %p372
      $region54: #{tpu_custom_call.1} parent=5 // pred_check_branch
        %375 = sbr.rel (%p373) target = $region56
      $region55: #{tpu_custom_call.1} parent=5 // pred_region
        // Predicated region
        $region57: #{tpu_custom_call.1} parent=55 // pred_check
          %p376 = pneg %p45
        $region58: #{tpu_custom_call.1} parent=55 // pred_check_branch
          %378 = sbr.rel (%p376) target = $region60
        $region59: #{tpu_custom_call.1} parent=55 // pred_region
          %s379 = sand.u32 %s35, 1
          %s380 = scalar_lea.sflag [#allocation3], %s379
          %s381 = sand.u32 %s35, 1
          %s382 = smul.addr %s381, 128
          %s383 = scalar_lea.vmem [#allocation2], %s382
          %s384 = smul.u32 8, %s25
          %s386 = ssub.s32 2048, 2048
          %387 = vsyncadd %s380, %s386
          %s388 = smul.addr %s384, 2
          %s389 = smul.addr %s388, 128
          %s390 = scalar_lea.hbm %s0, %s389
          %s391 = sshll.u32 %s383, 4
          %s392 = int_to_ptr.vmem [resolvable:$true] %s391
          %397 = dma.hbm_to_vmem [thread:$0]  %s390, 2048, %s392, %s380, 256, 256, 16
        $region60: #{tpu_custom_call.1} parent=55 // pred_fallthru
          _
      $region56: #{tpu_custom_call.1} parent=5 // pred_fallthru
        _
      %p398 = scmp.le.s32.totalorder 1, %s25
      %p399 = scmp.lt.s32.totalorder %s25, 3
      %p400 = pnand %p398, %p399
      %p401 = pneg %p400
      // Predicated region
      $region61: #{tpu_custom_call.1} parent=5 // pred_check
        _
      $region62: #{tpu_custom_call.1} parent=5 // pred_check_branch
        %403 = sbr.rel (%p400) target = $region64
      $region63: #{tpu_custom_call.1} parent=5 // pred_region
        %s404 = ssub.s32 %s25, 1
        %s405 = sand.u32 %s38, 1
        %s406 = scalar_lea.sflag [#allocation3], %s405
        %s407 = sand.u32 %s38, 1
        %s408 = smul.addr %s407, 128
        %s409 = scalar_lea.vmem [#allocation2], %s408
        // Predicated region
        $region65: #{tpu_custom_call.1} parent=63 // pred_check
          %p410 = pneg %p51
        $region66: #{tpu_custom_call.1} parent=63 // pred_check_branch
          %412 = sbr.rel (%p410) target = $region68
        $region67: #{tpu_custom_call.1} parent=63 // pred_region
          %413 = dma.done %s406, 2048
        $region68: #{tpu_custom_call.1} parent=63 // pred_fallthru
          _
        // Predicated region
        $region69: #{tpu_custom_call.1} parent=63 // pred_check
          %p414 = pneg %p72
        $region70: #{tpu_custom_call.1} parent=63 // pred_check_branch
          %416 = sbr.rel (%p414) target = $region72
        $region71: #{tpu_custom_call.1} parent=63 // pred_region
          %417 = dma.done [#allocation6], 4096
        $region72: #{tpu_custom_call.1} parent=63 // pred_fallthru
          _
        // Predicated region
        $region73: #{tpu_custom_call.1} parent=63 // pred_check
          %p418 = pneg %p135
        $region74: #{tpu_custom_call.1} parent=63 // pred_check_branch
          %420 = sbr.rel (%p418) target = $region76
        $region75: #{tpu_custom_call.1} parent=63 // pred_region
          %421 = dma.done [#allocation6], 2048
        $region76: #{tpu_custom_call.1} parent=63 // pred_fallthru
          _
        // Predicated region
        $region77: #{tpu_custom_call.1} parent=63 // pred_check
          %p422 = pneg %p198
        $region78: #{tpu_custom_call.1} parent=63 // pred_check_branch
          %424 = sbr.rel (%p422) target = $region80
        $region79: #{tpu_custom_call.1} parent=63 // pred_region
          %425 = dma.done [#allocation9], 2048
        $region80: #{tpu_custom_call.1} parent=63 // pred_fallthru
          _
        // Predicated region
        $region81: #{tpu_custom_call.1} parent=63 // pred_check
          %p426 = pneg %p261
        $region82: #{tpu_custom_call.1} parent=63 // pred_check_branch
          %428 = sbr.rel (%p426) target = $region84
        $region83: #{tpu_custom_call.1} parent=63 // pred_region
          %429 = dma.done [#allocation9], 2048
        $region84: #{tpu_custom_call.1} parent=63 // pred_fallthru
          _
        %s430 = sand.u32 %s38, 1
        %s431 = scalar_lea.sflag [#allocation3], %s430
        %s432 = sand.u32 %s38, 1
        %s433 = smul.addr %s432, 128
        %s434 = scalar_lea.vmem [#allocation2], %s433
        %p435 = pneg %p51
        %p436 = pneg %p48
        %p437 = pneg %p72
        %p438 = pneg %p69
        %p439 = pneg %p93
        %p440 = pneg %p90
        %p441 = pneg %p114
        %p442 = pneg %p111
        %p443 = pneg %p135
        %p444 = pneg %p132
        %p445 = pneg %p156
        %p446 = pneg %p153
        %p447 = pneg %p177
        %p448 = pneg %p174
        %p449 = pneg %p198
        %p450 = pneg %p195
        %p451 = pneg %p219
        %p452 = pneg %p216
        %p453 = pneg %p240
        %p454 = pneg %p237
        %p455 = pneg %p261
        %p456 = pneg %p258
        %p457 = pneg %p287
        %p458 = pneg %p284
        %s459 = sand.u32 %s274, 1
        %s460 = scalar_lea.sflag [#allocation4], %s459
        %s461 = sand.u32 %s274, 1
        %s462 = smul.addr %s461, 64
        %s463 = scalar_lea.vmem [#allocation11], %s462
        %s464 = smul.u32 8, %s30
        %s465 = smul.u32 8, %s30
        %v466 = vld [vmem:[%s409] sm:$0xff]
        %v467 = vld [vmem:[%s409 + $0x8] sm:$0xff]
        %v468 = vld [vmem:[%s409 + $0x10] sm:$0xff]
        %v469 = vld [vmem:[%s409 + $0x18] sm:$0xff]
        %v470 = vld [vmem:[%s409 + $0x20] sm:$0xff]
        %v471 = vld [vmem:[%s409 + $0x28] sm:$0xff]
        %v472 = vld [vmem:[%s409 + $0x30] sm:$0xff]
        %v473 = vld [vmem:[%s409 + $0x38] sm:$0xff]
        %v474 = vld [vmem:[%s409 + $0x40] sm:$0xff]
        %v475 = vld [vmem:[%s409 + $0x48] sm:$0xff]
        %v476 = vld [vmem:[%s409 + $0x50] sm:$0xff]
        %v477 = vld [vmem:[%s409 + $0x58] sm:$0xff]
        %v478 = vld [vmem:[%s409 + $0x60] sm:$0xff]
        %v479 = vld [vmem:[%s409 + $0x68] sm:$0xff]
        %v480 = vld [vmem:[%s409 + $0x70] sm:$0xff]
        %v481 = vld [vmem:[%s409 + $0x78] sm:$0xff]
        %v482 = vld [vmem:[#allocation10] sm:$0xff]
        %v483 = vld [vmem:[#allocation10 + $0x8] sm:$0xff]
        %v484 = vld [vmem:[#allocation10 + $0x10] sm:$0xff]
        %v485 = vld [vmem:[#allocation10 + $0x18] sm:$0xff]
        %v486 = vld [vmem:[#allocation10 + $0x20] sm:$0xff]
        %v487 = vld [vmem:[#allocation10 + $0x28] sm:$0xff]
        %v488 = vld [vmem:[#allocation10 + $0x30] sm:$0xff]
        %v489 = vld [vmem:[#allocation10 + $0x38] sm:$0xff]
        %v490 = vld [vmem:[#allocation10 + $0x40] sm:$0xff]
        %v491 = vld [vmem:[#allocation10 + $0x48] sm:$0xff]
        %v492 = vld [vmem:[#allocation10 + $0x50] sm:$0xff]
        %v493 = vld [vmem:[#allocation10 + $0x58] sm:$0xff]
        %v494 = vld [vmem:[#allocation10 + $0x60] sm:$0xff]
        %v495 = vld [vmem:[#allocation10 + $0x68] sm:$0xff]
        %v496 = vld [vmem:[#allocation10 + $0x70] sm:$0xff]
        %v497 = vld [vmem:[#allocation10 + $0x78] sm:$0xff]
        %v498 = vld [vmem:[#allocation5] sm:$0xff]
        %v499 = vld [vmem:[#allocation5 + $0x8] sm:$0xff]
        %v500 = vld [vmem:[#allocation5 + $0x10] sm:$0xff]
        %v501 = vld [vmem:[#allocation5 + $0x18] sm:$0xff]
        %v502 = vld [vmem:[#allocation5 + $0x20] sm:$0xff]
        %v503 = vld [vmem:[#allocation5 + $0x28] sm:$0xff]
        %v504 = vld [vmem:[#allocation5 + $0x30] sm:$0xff]
        %v505 = vld [vmem:[#allocation5 + $0x38] sm:$0xff]
        %v506 = vld [vmem:[#allocation5 + $0x40] sm:$0xff]
        %v507 = vld [vmem:[#allocation5 + $0x48] sm:$0xff]
        %v508 = vld [vmem:[#allocation5 + $0x50] sm:$0xff]
        %v509 = vld [vmem:[#allocation5 + $0x58] sm:$0xff]
        %v510 = vld [vmem:[#allocation5 + $0x60] sm:$0xff]
        %v511 = vld [vmem:[#allocation5 + $0x68] sm:$0xff]
        %v512 = vld [vmem:[#allocation5 + $0x70] sm:$0xff]
        %v513 = vld [vmem:[#allocation5 + $0x78] sm:$0xff]
        %v514 = vld [vmem:[#allocation5 + $0x80] sm:$0xff]
        %v515 = vld [vmem:[#allocation5 + $0x88] sm:$0xff]
        %v516 = vld [vmem:[#allocation5 + $0x90] sm:$0xff]
        %v517 = vld [vmem:[#allocation5 + $0x98] sm:$0xff]
        %v518 = vld [vmem:[#allocation5 + $0xa0] sm:$0xff]
        %v519 = vld [vmem:[#allocation5 + $0xa8] sm:$0xff]
        %v520 = vld [vmem:[#allocation5 + $0xb0] sm:$0xff]
        %v521 = vld [vmem:[#allocation5 + $0xb8] sm:$0xff]
        %v522 = vld [vmem:[#allocation5 + $0xc0] sm:$0xff]
        %v523 = vld [vmem:[#allocation5 + $0xc8] sm:$0xff]
        %v524 = vld [vmem:[#allocation5 + $0xd0] sm:$0xff]
        %v525 = vld [vmem:[#allocation5 + $0xd8] sm:$0xff]
        %v526 = vld [vmem:[#allocation5 + $0xe0] sm:$0xff]
        %v527 = vld [vmem:[#allocation5 + $0xe8] sm:$0xff]
        %v528 = vld [vmem:[#allocation5 + $0xf0] sm:$0xff]
        %v529 = vld [vmem:[#allocation5 + $0xf8] sm:$0xff]
        %530 = vmatprep.subr.mxu0 0.0
        %531 = vmatpush1.msra.mxu0 %v498
        %532 = vmatprep.subr.mxu0 0.0
        %533 = vmatpush1.msra.mxu0 %v499
        %534 = vmatprep.subr.mxu0 0.0
        %535 = vmatpush1.msra.mxu0 %v500
        %536 = vmatprep.subr.mxu0 0.0
        %537 = vmatpush1.msra.mxu0 %v501
        %538 = vmatprep.subr.mxu0 0.0
        %539 = vmatpush1.msra.mxu0 %v502
        %540 = vmatprep.subr.mxu0 0.0
        %541 = vmatpush1.msra.mxu0 %v503
        %542 = vmatprep.subr.mxu0 0.0
        %543 = vmatpush1.msra.mxu0 %v504
        %544 = vmatprep.subr.mxu0 0.0
        %545 = vmatpush1.msra.mxu0 %v505
        %546 = vmatprep.subr.mxu0 0.0
        %547 = vmatpush1.msra.mxu0 %v506
        %548 = vmatprep.subr.mxu0 0.0
        %549 = vmatpush1.msra.mxu0 %v507
        %550 = vmatprep.subr.mxu0 0.0
        %551 = vmatpush1.msra.mxu0 %v508
        %552 = vmatprep.subr.mxu0 0.0
        %553 = vmatpush1.msra.mxu0 %v509
        %554 = vmatprep.subr.mxu0 0.0
        %555 = vmatpush1.msra.mxu0 %v510
        %556 = vmatprep.subr.mxu0 0.0
        %557 = vmatpush1.msra.mxu0 %v511
        %558 = vmatprep.subr.mxu0 0.0
        %559 = vmatpush1.msra.mxu0 %v512
        %560 = vmatprep.subr.mxu0 0.0
        %561 = vmatpush1.msra.mxu0 %v513
        %562 = vmatprep.subr.mxu0 0.0
        %563 = vmatpush1.msra.mxu0 %v514
        %564 = vmatprep.subr.mxu0 0.0
        %565 = vmatpush1.msra.mxu0 %v515
        %566 = vmatprep.subr.mxu0 0.0
        %567 = vmatpush1.msra.mxu0 %v516
        %568 = vmatprep.subr.mxu0 0.0
        %569 = vmatpush1.msra.mxu0 %v517
        %570 = vmatprep.subr.mxu0 0.0
        %571 = vmatpush1.msra.mxu0 %v518
        %572 = vmatprep.subr.mxu0 0.0
        %573 = vmatpush1.msra.mxu0 %v519
        %574 = vmatprep.subr.mxu0 0.0
        %575 = vmatpush1.msra.mxu0 %v520
        %576 = vmatprep.subr.mxu0 0.0
        %577 = vmatpush1.msra.mxu0 %v521
        %578 = vmatprep.subr.mxu0 0.0
        %579 = vmatpush1.msra.mxu0 %v522
        %580 = vmatprep.subr.mxu0 0.0
        %581 = vmatpush1.msra.mxu0 %v523
        %582 = vmatprep.subr.mxu0 0.0
        %583 = vmatpush1.msra.mxu0 %v524
        %584 = vmatprep.subr.mxu0 0.0
        %585 = vmatpush1.msra.mxu0 %v525
        %586 = vmatprep.subr.mxu0 0.0
        %587 = vmatpush1.msra.mxu0 %v526
        %588 = vmatprep.subr.mxu0 0.0
        %589 = vmatpush1.msra.mxu0 %v527
        %590 = vmatprep.subr.mxu0 0.0
        %591 = vmatpush1.msra.mxu0 %v528
        %592 = vmatprep.subr.mxu0 0.0
        %593 = vmatpush1.msra.mxu0 %v529
        %594 = vmatprep.mubr.f32.mxu0 %v467
        %595 = vmatmul.mubr.f32.gmra.mrb[0].mxu0 %v466
        %v596 = vpop.f32.mrb[0].mxu0
        %v597 = vadd.f32 0.0, %v596
        %v598 = vpop.f32.mrb[0].mxu0
        %599 = vmatprep.mubr.f32.mxu0 %v469
        %600 = vmatmul.mubr.f32.gmra.mrb[0].mxu0 %v468
        %v601 = vpop.f32.mrb[0].mxu0
        %v602 = vadd.f32 0.0, %v601
        %v603 = vpop.f32.mrb[0].mxu0
        %604 = vmatprep.mubr.f32.mxu0 %v471
        %605 = vmatmul.mubr.f32.gmra.mrb[0].mxu0 %v470
        %v606 = vpop.f32.mrb[0].mxu0
        %v607 = vadd.f32 0.0, %v606
        %v608 = vpop.f32.mrb[0].mxu0
        %609 = vmatprep.mubr.f32.mxu0 %v473
        %610 = vmatmul.mubr.f32.gmra.mrb[0].mxu0 %v472
        %v611 = vpop.f32.mrb[0].mxu0
        %v612 = vadd.f32 0.0, %v611
        %v613 = vpop.f32.mrb[0].mxu0
        %614 = vmatprep.mubr.f32.mxu0 %v475
        %615 = vmatmul.mubr.f32.gmra.mrb[0].mxu0 %v474
        %v616 = vpop.f32.mrb[0].mxu0
        %v617 = vadd.f32 0.0, %v616
        %v618 = vpop.f32.mrb[0].mxu0
        %619 = vmatprep.mubr.f32.mxu0 %v477
        %620 = vmatmul.mubr.f32.gmra.mrb[0].mxu0 %v476
        %v621 = vpop.f32.mrb[0].mxu0
        %v622 = vadd.f32 0.0, %v621
        %v623 = vpop.f32.mrb[0].mxu0
        %624 = vmatprep.mubr.f32.mxu0 %v479
        %625 = vmatmul.mubr.f32.gmra.mrb[0].mxu0 %v478
        %v626 = vpop.f32.mrb[0].mxu0
        %v627 = vadd.f32 0.0, %v626
        %v628 = vpop.f32.mrb[0].mxu0
        %629 = vmatprep.mubr.f32.mxu0 %v481
        %630 = vmatmul.mubr.f32.gmra.mrb[0].mxu0 %v480
        %v631 = vpop.f32.mrb[0].mxu0
        %v632 = vadd.f32 0.0, %v631
        %v633 = vpop.f32.mrb[0].mxu0
        %634 = vdwg.mxu0
        %vm635 = vcmp.ge.f32.partialorder %v597, 0.0
        %vm636 = vcmp.ge.f32.partialorder %v602, 0.0
        %vm637 = vcmp.ge.f32.partialorder %v607, 0.0
        %vm638 = vcmp.ge.f32.partialorder %v612, 0.0
        %vm639 = vcmp.ge.f32.partialorder %v617, 0.0
        %vm640 = vcmp.ge.f32.partialorder %v622, 0.0
        %vm641 = vcmp.ge.f32.partialorder %v627, 0.0
        %vm642 = vcmp.ge.f32.partialorder %v632, 0.0
        %v643 = vmul.f32 %v597, 0.01
        %v644 = vmul.f32 %v602, 0.01
        %v645 = vmul.f32 %v607, 0.01
        %v646 = vmul.f32 %v612, 0.01
        %v647 = vmul.f32 %v617, 0.01
        %v648 = vmul.f32 %v622, 0.01
        %v649 = vmul.f32 %v627, 0.01
        %v650 = vmul.f32 %v632, 0.01
        %v651 = vsel %vm635, %v597, %v643
        %v652 = vsel %vm636, %v602, %v644
        %v653 = vsel %vm637, %v607, %v645
        %v654 = vsel %vm638, %v612, %v646
        %v655 = vsel %vm639, %v617, %v647
        %v656 = vsel %vm640, %v622, %v648
        %v657 = vsel %vm641, %v627, %v649
        %v658 = vsel %vm642, %v632, %v650
        %659 = vmatprep.subr.mxu0 0.0
        %660 = vmatpush1.msra.mxu0 %v482
        %661 = vmatprep.subr.mxu0 0.0
        %662 = vmatpush1.msra.mxu0 %v483
        %663 = vmatprep.subr.mxu0 0.0
        %664 = vmatpush1.msra.mxu0 %v484
        %665 = vmatprep.subr.mxu0 0.0
        %666 = vmatpush1.msra.mxu0 %v485
        %667 = vmatprep.subr.mxu0 0.0
        %668 = vmatpush1.msra.mxu0 %v486
        %669 = vmatprep.subr.mxu0 0.0
        %670 = vmatpush1.msra.mxu0 %v487
        %671 = vmatprep.subr.mxu0 0.0
        %672 = vmatpush1.msra.mxu0 %v488
        %673 = vmatprep.subr.mxu0 0.0
        %674 = vmatpush1.msra.mxu0 %v489
        %675 = vmatprep.subr.mxu0 0.0
        %676 = vmatpush1.msra.mxu0 %v490
        %677 = vmatprep.subr.mxu0 0.0
        %678 = vmatpush1.msra.mxu0 %v491
        %679 = vmatprep.subr.mxu0 0.0
        %680 = vmatpush1.msra.mxu0 %v492
        %681 = vmatprep.subr.mxu0 0.0
        %682 = vmatpush1.msra.mxu0 %v493
        %683 = vmatprep.subr.mxu0 0.0
        %684 = vmatpush1.msra.mxu0 %v494
        %685 = vmatprep.subr.mxu0 0.0
        %686 = vmatpush1.msra.mxu0 %v495
        %687 = vmatprep.subr.mxu0 0.0
        %688 = vmatpush1.msra.mxu0 %v496
        %689 = vmatprep.subr.mxu0 0.0
        %690 = vmatpush1.msra.mxu0 %v497
        %691 = vmatprep.subr.mxu0 0.0
        %692 = vmatpush1.msra.mxu0 0.0
        %693 = vmatprep.subr.mxu0 0.0
        %694 = vmatpush1.msra.mxu0 0.0
        %695 = vmatprep.subr.mxu0 0.0
        %696 = vmatpush1.msra.mxu0 0.0
        %697 = vmatprep.subr.mxu0 0.0
        %698 = vmatpush1.msra.mxu0 0.0
        %699 = vmatprep.subr.mxu0 0.0
        %700 = vmatpush1.msra.mxu0 0.0
        %701 = vmatprep.subr.mxu0 0.0
        %702 = vmatpush1.msra.mxu0 0.0
        %703 = vmatprep.subr.mxu0 0.0
        %704 = vmatpush1.msra.mxu0 0.0
        %705 = vmatprep.subr.mxu0 0.0
        %706 = vmatpush1.msra.mxu0 0.0
        %707 = vmatprep.subr.mxu0 0.0
        %708 = vmatpush1.msra.mxu0 0.0
        %709 = vmatprep.subr.mxu0 0.0
        %710 = vmatpush1.msra.mxu0 0.0
        %711 = vmatprep.subr.mxu0 0.0
        %712 = vmatpush1.msra.mxu0 0.0
        %713 = vmatprep.subr.mxu0 0.0
        %714 = vmatpush1.msra.mxu0 0.0
        %715 = vmatprep.subr.mxu0 0.0
        %716 = vmatpush1.msra.mxu0 0.0
        %717 = vmatprep.subr.mxu0 0.0
        %718 = vmatpush1.msra.mxu0 0.0
        %719 = vmatprep.subr.mxu0 0.0
        %720 = vmatpush1.msra.mxu0 0.0
        %721 = vmatprep.subr.mxu0 0.0
        %722 = vmatpush1.msra.mxu0 0.0
        %723 = vmatprep.mubr.f32.mxu0 0.0
        %724 = vmatmul.mubr.f32.gmra.mrb[0].mxu0 %v651
        %v725 = vpop.f32.mrb[0].mxu0
        %v726 = vadd.f32 0.0, %v725
        %v727 = vpop.f32.mrb[0].mxu0
        %728 = vmatprep.mubr.f32.mxu0 0.0
        %729 = vmatmul.mubr.f32.gmra.mrb[0].mxu0 %v652
        %v730 = vpop.f32.mrb[0].mxu0
        %v731 = vadd.f32 0.0, %v730
        %v732 = vpop.f32.mrb[0].mxu0
        %733 = vmatprep.mubr.f32.mxu0 0.0
        %734 = vmatmul.mubr.f32.gmra.mrb[0].mxu0 %v653
        %v735 = vpop.f32.mrb[0].mxu0
        %v736 = vadd.f32 0.0, %v735
        %v737 = vpop.f32.mrb[0].mxu0
        %738 = vmatprep.mubr.f32.mxu0 0.0
        %739 = vmatmul.mubr.f32.gmra.mrb[0].mxu0 %v654
        %v740 = vpop.f32.mrb[0].mxu0
        %v741 = vadd.f32 0.0, %v740
        %v742 = vpop.f32.mrb[0].mxu0
        %743 = vmatprep.mubr.f32.mxu0 0.0
        %744 = vmatmul.mubr.f32.gmra.mrb[0].mxu0 %v655
        %v745 = vpop.f32.mrb[0].mxu0
        %v746 = vadd.f32 0.0, %v745
        %v747 = vpop.f32.mrb[0].mxu0
        %748 = vmatprep.mubr.f32.mxu0 0.0
        %749 = vmatmul.mubr.f32.gmra.mrb[0].mxu0 %v656
        %v750 = vpop.f32.mrb[0].mxu0
        %v751 = vadd.f32 0.0, %v750
        %v752 = vpop.f32.mrb[0].mxu0
        %753 = vmatprep.mubr.f32.mxu0 0.0
        %754 = vmatmul.mubr.f32.gmra.mrb[0].mxu0 %v657
        %v755 = vpop.f32.mrb[0].mxu0
        %v756 = vadd.f32 0.0, %v755
        %v757 = vpop.f32.mrb[0].mxu0
        %758 = vmatprep.mubr.f32.mxu0 0.0
        %759 = vmatmul.mubr.f32.gmra.mrb[0].mxu0 %v658
        %v760 = vpop.f32.mrb[0].mxu0
        %v761 = vadd.f32 0.0, %v760
        %v762 = vpop.f32.mrb[0].mxu0
        %763 = vdwg.mxu0
        %v764 = vsub.f32 %v651, %v726
        %v765 = vsub.f32 %v652, %v731
        %v766 = vsub.f32 %v653, %v736
        %v767 = vsub.f32 %v654, %v741
        %v768 = vsub.f32 %v655, %v746
        %v769 = vsub.f32 %v656, %v751
        %v770 = vsub.f32 %v657, %v756
        %v771 = vsub.f32 %v658, %v761
        %v772 = vmul.f32 %v764, %v764
        %v773 = vmul.f32 %v765, %v765
        %v774 = vmul.f32 %v766, %v766
        %v775 = vmul.f32 %v767, %v767
        %v776 = vmul.f32 %v768, %v768
        %v777 = vmul.f32 %v769, %v769
        %v778 = vmul.f32 %v770, %v770
        %v779 = vmul.f32 %v771, %v771
        %780 = vmatprep.subr.mxu0 0.0
        %781 = vmatpush1.msra.mxu0 %v482
        %782 = vmatprep.subr.mxu0 0.0
        %783 = vmatpush1.msra.mxu0 %v483
        %784 = vmatprep.subr.mxu0 0.0
        %785 = vmatpush1.msra.mxu0 %v484
        %786 = vmatprep.subr.mxu0 0.0
        %787 = vmatpush1.msra.mxu0 %v485
        %788 = vmatprep.subr.mxu0 0.0
        %789 = vmatpush1.msra.mxu0 %v486
        %790 = vmatprep.subr.mxu0 0.0
        %791 = vmatpush1.msra.mxu0 %v487
        %792 = vmatprep.subr.mxu0 0.0
        %793 = vmatpush1.msra.mxu0 %v488
        %794 = vmatprep.subr.mxu0 0.0
        %795 = vmatpush1.msra.mxu0 %v489
        %796 = vmatprep.subr.mxu0 0.0
        %797 = vmatpush1.msra.mxu0 %v490
        %798 = vmatprep.subr.mxu0 0.0
        %799 = vmatpush1.msra.mxu0 %v491
        %800 = vmatprep.subr.mxu0 0.0
        %801 = vmatpush1.msra.mxu0 %v492
        %802 = vmatprep.subr.mxu0 0.0
        %803 = vmatpush1.msra.mxu0 %v493
        %804 = vmatprep.subr.mxu0 0.0
        %805 = vmatpush1.msra.mxu0 %v494
        %806 = vmatprep.subr.mxu0 0.0
        %807 = vmatpush1.msra.mxu0 %v495
        %808 = vmatprep.subr.mxu0 0.0
        %809 = vmatpush1.msra.mxu0 %v496
        %810 = vmatprep.subr.mxu0 0.0
        %811 = vmatpush1.msra.mxu0 %v497
        %812 = vmatprep.subr.mxu0 0.0
        %813 = vmatpush1.msra.mxu0 0.0
        %814 = vmatprep.subr.mxu0 0.0
        %815 = vmatpush1.msra.mxu0 0.0
        %816 = vmatprep.subr.mxu0 0.0
        %817 = vmatpush1.msra.mxu0 0.0
        %818 = vmatprep.subr.mxu0 0.0
        %819 = vmatpush1.msra.mxu0 0.0
        %820 = vmatprep.subr.mxu0 0.0
        %821 = vmatpush1.msra.mxu0 0.0
        %822 = vmatprep.subr.mxu0 0.0
        %823 = vmatpush1.msra.mxu0 0.0
        %824 = vmatprep.subr.mxu0 0.0
        %825 = vmatpush1.msra.mxu0 0.0
        %826 = vmatprep.subr.mxu0 0.0
        %827 = vmatpush1.msra.mxu0 0.0
        %828 = vmatprep.subr.mxu0 0.0
        %829 = vmatpush1.msra.mxu0 0.0
        %830 = vmatprep.subr.mxu0 0.0
        %831 = vmatpush1.msra.mxu0 0.0
        %832 = vmatprep.subr.mxu0 0.0
        %833 = vmatpush1.msra.mxu0 0.0
        %834 = vmatprep.subr.mxu0 0.0
        %835 = vmatpush1.msra.mxu0 0.0
        %836 = vmatprep.subr.mxu0 0.0
        %837 = vmatpush1.msra.mxu0 0.0
        %838 = vmatprep.subr.mxu0 0.0
        %839 = vmatpush1.msra.mxu0 0.0
        %840 = vmatprep.subr.mxu0 0.0
        %841 = vmatpush1.msra.mxu0 0.0
        %842 = vmatprep.subr.mxu0 0.0
        %843 = vmatpush1.msra.mxu0 0.0
        %844 = vmatprep.mubr.f32.mxu0 0.0
        %845 = vmatmul.mubr.f32.gmra.mrb[0].mxu0 %v772
        %v846 = vpop.f32.mrb[0].mxu0
        %v847 = vadd.f32 1e-05, %v846
        %v848 = vpop.f32.mrb[0].mxu0
        %849 = vmatprep.mubr.f32.mxu0 0.0
        %850 = vmatmul.mubr.f32.gmra.mrb[0].mxu0 %v773
        %v851 = vpop.f32.mrb[0].mxu0
        %v852 = vadd.f32 1e-05, %v851
        %v853 = vpop.f32.mrb[0].mxu0
        %854 = vmatprep.mubr.f32.mxu0 0.0
        %855 = vmatmul.mubr.f32.gmra.mrb[0].mxu0 %v774
        %v856 = vpop.f32.mrb[0].mxu0
        %v857 = vadd.f32 1e-05, %v856
        %v858 = vpop.f32.mrb[0].mxu0
        %859 = vmatprep.mubr.f32.mxu0 0.0
        %860 = vmatmul.mubr.f32.gmra.mrb[0].mxu0 %v775
        %v861 = vpop.f32.mrb[0].mxu0
        %v862 = vadd.f32 1e-05, %v861
        %v863 = vpop.f32.mrb[0].mxu0
        %864 = vmatprep.mubr.f32.mxu0 0.0
        %865 = vmatmul.mubr.f32.gmra.mrb[0].mxu0 %v776
        %v866 = vpop.f32.mrb[0].mxu0
        %v867 = vadd.f32 1e-05, %v866
        %v868 = vpop.f32.mrb[0].mxu0
        %869 = vmatprep.mubr.f32.mxu0 0.0
        %870 = vmatmul.mubr.f32.gmra.mrb[0].mxu0 %v777
        %v871 = vpop.f32.mrb[0].mxu0
        %v872 = vadd.f32 1e-05, %v871
        %v873 = vpop.f32.mrb[0].mxu0
        %874 = vmatprep.mubr.f32.mxu0 0.0
        %875 = vmatmul.mubr.f32.gmra.mrb[0].mxu0 %v778
        %v876 = vpop.f32.mrb[0].mxu0
        %v877 = vadd.f32 1e-05, %v876
        %v878 = vpop.f32.mrb[0].mxu0
        %879 = vmatprep.mubr.f32.mxu0 0.0
        %880 = vmatmul.mubr.f32.gmra.mrb[0].mxu0 %v779
        %v881 = vpop.f32.mrb[0].mxu0
        %v882 = vadd.f32 1e-05, %v881
        %v883 = vpop.f32.mrb[0].mxu0
        %884 = vdwg.mxu0
        %v885 = vrsqrt.pop %v847
        %v886 = vrsqrt.pop %v852
        %v887 = vrsqrt.pop %v857
        %v888 = vrsqrt.pop %v862
        %v889 = vrsqrt.pop %v867
        %v890 = vrsqrt.pop %v872
        %v891 = vrsqrt.pop %v877
        %v892 = vrsqrt.pop %v882
        %v893 = vmul.f32 %v764, %v885
        %v894 = vmul.f32 %v765, %v886
        %v895 = vmul.f32 %v766, %v887
        %v896 = vmul.f32 %v767, %v888
        %v897 = vmul.f32 %v768, %v889
        %v898 = vmul.f32 %v769, %v890
        %v899 = vmul.f32 %v770, %v891
        %v900 = vmul.f32 %v771, %v892
        %v901 = vld [vmem:[%s2] sm:$0x1]
        %v903 = vlaneseq
        %v904 = vshrl.u32 %v903, 7
        %v905 = vsub.s32 0, %v904
        %v906 = vrot.slane %v901, %v905
        %v908 = vmul.f32 %v893, %v906
        %v909 = vmul.f32 %v894, %v906
        %v910 = vmul.f32 %v895, %v906
        %v911 = vmul.f32 %v896, %v906
        %v912 = vmul.f32 %v897, %v906
        %v913 = vmul.f32 %v898, %v906
        %v914 = vmul.f32 %v899, %v906
        %v915 = vmul.f32 %v900, %v906
        %v916 = vld [vmem:[%s3] sm:$0x1]
        %v918 = vlaneseq
        %v919 = vshrl.u32 %v918, 7
        %v920 = vsub.s32 0, %v919
        %v921 = vrot.slane %v916, %v920
        %v923 = vadd.f32 %v908, %v921
        %v924 = vadd.f32 %v909, %v921
        %v925 = vadd.f32 %v910, %v921
        %v926 = vadd.f32 %v911, %v921
        %v927 = vadd.f32 %v912, %v921
        %v928 = vadd.f32 %v913, %v921
        %v929 = vadd.f32 %v914, %v921
        %v930 = vadd.f32 %v915, %v921
        %v931 = vld [vmem:[#allocation7] sm:$0xff]
        %v932 = vld [vmem:[#allocation7 + $0x8] sm:$0xff]
        %v933 = vld [vmem:[#allocation7 + $0x10] sm:$0xff]
        %v934 = vld [vmem:[#allocation7 + $0x18] sm:$0xff]
        %v935 = vld [vmem:[#allocation7 + $0x20] sm:$0xff]
        %v936 = vld [vmem:[#allocation7 + $0x28] sm:$0xff]
        %v937 = vld [vmem:[#allocation7 + $0x30] sm:$0xff]
        %v938 = vld [vmem:[#allocation7 + $0x38] sm:$0xff]
        %v939 = vld [vmem:[#allocation7 + $0x40] sm:$0xff]
        %v940 = vld [vmem:[#allocation7 + $0x48] sm:$0xff]
        %v941 = vld [vmem:[#allocation7 + $0x50] sm:$0xff]
        %v942 = vld [vmem:[#allocation7 + $0x58] sm:$0xff]
        %v943 = vld [vmem:[#allocation7 + $0x60] sm:$0xff]
        %v944 = vld [vmem:[#allocation7 + $0x68] sm:$0xff]
        %v945 = vld [vmem:[#allocation7 + $0x70] sm:$0xff]
        %v946 = vld [vmem:[#allocation7 + $0x78] sm:$0xff]
        %947 = vmatprep.subr.mxu0 0.0
        %948 = vmatpush1.msra.mxu0 %v931
        %949 = vmatprep.subr.mxu0 0.0
        %950 = vmatpush1.msra.mxu0 %v932
        %951 = vmatprep.subr.mxu0 0.0
        %952 = vmatpush1.msra.mxu0 %v933
        %953 = vmatprep.subr.mxu0 0.0
        %954 = vmatpush1.msra.mxu0 %v934
        %955 = vmatprep.subr.mxu0 0.0
        %956 = vmatpush1.msra.mxu0 %v935
        %957 = vmatprep.subr.mxu0 0.0
        %958 = vmatpush1.msra.mxu0 %v936
        %959 = vmatprep.subr.mxu0 0.0
        %960 = vmatpush1.msra.mxu0 %v937
        %961 = vmatprep.subr.mxu0 0.0
        %962 = vmatpush1.msra.mxu0 %v938
        %963 = vmatprep.subr.mxu0 0.0
        %964 = vmatpush1.msra.mxu0 %v939
        %965 = vmatprep.subr.mxu0 0.0
        %966 = vmatpush1.msra.mxu0 %v940
        %967 = vmatprep.subr.mxu0 0.0
        %968 = vmatpush1.msra.mxu0 %v941
        %969 = vmatprep.subr.mxu0 0.0
        %970 = vmatpush1.msra.mxu0 %v942
        %971 = vmatprep.subr.mxu0 0.0
        %972 = vmatpush1.msra.mxu0 %v943
        %973 = vmatprep.subr.mxu0 0.0
        %974 = vmatpush1.msra.mxu0 %v944
        %975 = vmatprep.subr.mxu0 0.0
        %976 = vmatpush1.msra.mxu0 %v945
        %977 = vmatprep.subr.mxu0 0.0
        %978 = vmatpush1.msra.mxu0 %v946
        %979 = vmatprep.subr.mxu0 0.0
        %980 = vmatpush1.msra.mxu0 0.0
        %981 = vmatprep.subr.mxu0 0.0
        %982 = vmatpush1.msra.mxu0 0.0
        %983 = vmatprep.subr.mxu0 0.0
        %984 = vmatpush1.msra.mxu0 0.0
        %985 = vmatprep.subr.mxu0 0.0
        %986 = vmatpush1.msra.mxu0 0.0
        %987 = vmatprep.subr.mxu0 0.0
        %988 = vmatpush1.msra.mxu0 0.0
        %989 = vmatprep.subr.mxu0 0.0
        %990 = vmatpush1.msra.mxu0 0.0
        %991 = vmatprep.subr.mxu0 0.0
        %992 = vmatpush1.msra.mxu0 0.0
        %993 = vmatprep.subr.mxu0 0.0
        %994 = vmatpush1.msra.mxu0 0.0
        %995 = vmatprep.subr.mxu0 0.0
        %996 = vmatpush1.msra.mxu0 0.0
        %997 = vmatprep.subr.mxu0 0.0
        %998 = vmatpush1.msra.mxu0 0.0
        %999 = vmatprep.subr.mxu0 0.0
        %1000 = vmatpush1.msra.mxu0 0.0
        %1001 = vmatprep.subr.mxu0 0.0
        %1002 = vmatpush1.msra.mxu0 0.0
        %1003 = vmatprep.subr.mxu0 0.0
        %1004 = vmatpush1.msra.mxu0 0.0
        %1005 = vmatprep.subr.mxu0 0.0
        %1006 = vmatpush1.msra.mxu0 0.0
        %1007 = vmatprep.subr.mxu0 0.0
        %1008 = vmatpush1.msra.mxu0 0.0
        %1009 = vmatprep.subr.mxu0 0.0
        %1010 = vmatpush1.msra.mxu0 0.0
        %1011 = vmatprep.mubr.f32.mxu0 0.0
        %1012 = vmatmul.mubr.f32.gmra.mrb[0].mxu0 %v923
        %v1013 = vpop.f32.mrb[0].mxu0
        %v1014 = vadd.f32 0.0, %v1013
        %v1015 = vpop.f32.mrb[0].mxu0
        %1016 = vmatprep.mubr.f32.mxu0 0.0
        %1017 = vmatmul.mubr.f32.gmra.mrb[0].mxu0 %v924
        %v1018 = vpop.f32.mrb[0].mxu0
        %v1019 = vadd.f32 0.0, %v1018
        %v1020 = vpop.f32.mrb[0].mxu0
        %1021 = vmatprep.mubr.f32.mxu0 0.0
        %1022 = vmatmul.mubr.f32.gmra.mrb[0].mxu0 %v925
        %v1023 = vpop.f32.mrb[0].mxu0
        %v1024 = vadd.f32 0.0, %v1023
        %v1025 = vpop.f32.mrb[0].mxu0
        %1026 = vmatprep.mubr.f32.mxu0 0.0
        %1027 = vmatmul.mubr.f32.gmra.mrb[0].mxu0 %v926
        %v1028 = vpop.f32.mrb[0].mxu0
        %v1029 = vadd.f32 0.0, %v1028
        %v1030 = vpop.f32.mrb[0].mxu0
        %1031 = vmatprep.mubr.f32.mxu0 0.0
        %1032 = vmatmul.mubr.f32.gmra.mrb[0].mxu0 %v927
        %v1033 = vpop.f32.mrb[0].mxu0
        %v1034 = vadd.f32 0.0, %v1033
        %v1035 = vpop.f32.mrb[0].mxu0
        %1036 = vmatprep.mubr.f32.mxu0 0.0
        %1037 = vmatmul.mubr.f32.gmra.mrb[0].mxu0 %v928
        %v1038 = vpop.f32.mrb[0].mxu0
        %v1039 = vadd.f32 0.0, %v1038
        %v1040 = vpop.f32.mrb[0].mxu0
        %1041 = vmatprep.mubr.f32.mxu0 0.0
        %1042 = vmatmul.mubr.f32.gmra.mrb[0].mxu0 %v929
        %v1043 = vpop.f32.mrb[0].mxu0
        %v1044 = vadd.f32 0.0, %v1043
        %v1045 = vpop.f32.mrb[0].mxu0
        %1046 = vmatprep.mubr.f32.mxu0 0.0
        %1047 = vmatmul.mubr.f32.gmra.mrb[0].mxu0 %v930
        %v1048 = vpop.f32.mrb[0].mxu0
        %v1049 = vadd.f32 0.0, %v1048
        %v1050 = vpop.f32.mrb[0].mxu0
        %1051 = vdwg.mxu0
        %vm1052 = vcmp.ge.f32.partialorder %v1014, 0.0
        %vm1053 = vcmp.ge.f32.partialorder %v1019, 0.0
        %vm1054 = vcmp.ge.f32.partialorder %v1024, 0.0
        %vm1055 = vcmp.ge.f32.partialorder %v1029, 0.0
        %vm1056 = vcmp.ge.f32.partialorder %v1034, 0.0
        %vm1057 = vcmp.ge.f32.partialorder %v1039, 0.0
        %vm1058 = vcmp.ge.f32.partialorder %v1044, 0.0
        %vm1059 = vcmp.ge.f32.partialorder %v1049, 0.0
        %v1060 = vmul.f32 %v1014, 0.01
        %v1061 = vmul.f32 %v1019, 0.01
        %v1062 = vmul.f32 %v1024, 0.01
        %v1063 = vmul.f32 %v1029, 0.01
        %v1064 = vmul.f32 %v1034, 0.01
        %v1065 = vmul.f32 %v1039, 0.01
        %v1066 = vmul.f32 %v1044, 0.01
        %v1067 = vmul.f32 %v1049, 0.01
        %v1068 = vsel %vm1052, %v1014, %v1060
        %v1069 = vsel %vm1053, %v1019, %v1061
        %v1070 = vsel %vm1054, %v1024, %v1062
        %v1071 = vsel %vm1055, %v1029, %v1063
        %v1072 = vsel %vm1056, %v1034, %v1064
        %v1073 = vsel %vm1057, %v1039, %v1065
        %v1074 = vsel %vm1058, %v1044, %v1066
        %v1075 = vsel %vm1059, %v1049, %v1067
        %1076 = vmatprep.subr.mxu0 0.0
        %1077 = vmatpush1.msra.mxu0 %v482
        %1078 = vmatprep.subr.mxu0 0.0
        %1079 = vmatpush1.msra.mxu0 %v483
        %1080 = vmatprep.subr.mxu0 0.0
        %1081 = vmatpush1.msra.mxu0 %v484
        %1082 = vmatprep.subr.mxu0 0.0
        %1083 = vmatpush1.msra.mxu0 %v485
        %1084 = vmatprep.subr.mxu0 0.0
        %1085 = vmatpush1.msra.mxu0 %v486
        %1086 = vmatprep.subr.mxu0 0.0
        %1087 = vmatpush1.msra.mxu0 %v487
        %1088 = vmatprep.subr.mxu0 0.0
        %1089 = vmatpush1.msra.mxu0 %v488
        %1090 = vmatprep.subr.mxu0 0.0
        %1091 = vmatpush1.msra.mxu0 %v489
        %1092 = vmatprep.subr.mxu0 0.0
        %1093 = vmatpush1.msra.mxu0 %v490
        %1094 = vmatprep.subr.mxu0 0.0
        %1095 = vmatpush1.msra.mxu0 %v491
        %1096 = vmatprep.subr.mxu0 0.0
        %1097 = vmatpush1.msra.mxu0 %v492
        %1098 = vmatprep.subr.mxu0 0.0
        %1099 = vmatpush1.msra.mxu0 %v493
        %1100 = vmatprep.subr.mxu0 0.0
        %1101 = vmatpush1.msra.mxu0 %v494
        %1102 = vmatprep.subr.mxu0 0.0
        %1103 = vmatpush1.msra.mxu0 %v495
        %1104 = vmatprep.subr.mxu0 0.0
        %1105 = vmatpush1.msra.mxu0 %v496
        %1106 = vmatprep.subr.mxu0 0.0
        %1107 = vmatpush1.msra.mxu0 %v497
        %1108 = vmatprep.subr.mxu0 0.0
        %1109 = vmatpush1.msra.mxu0 0.0
        %1110 = vmatprep.subr.mxu0 0.0
        %1111 = vmatpush1.msra.mxu0 0.0
        %1112 = vmatprep.subr.mxu0 0.0
        %1113 = vmatpush1.msra.mxu0 0.0
        %1114 = vmatprep.subr.mxu0 0.0
        %1115 = vmatpush1.msra.mxu0 0.0
        %1116 = vmatprep.subr.mxu0 0.0
        %1117 = vmatpush1.msra.mxu0 0.0
        %1118 = vmatprep.subr.mxu0 0.0
        %1119 = vmatpush1.msra.mxu0 0.0
        %1120 = vmatprep.subr.mxu0 0.0
        %1121 = vmatpush1.msra.mxu0 0.0
        %1122 = vmatprep.subr.mxu0 0.0
        %1123 = vmatpush1.msra.mxu0 0.0
        %1124 = vmatprep.subr.mxu0 0.0
        %1125 = vmatpush1.msra.mxu0 0.0
        %1126 = vmatprep.subr.mxu0 0.0
        %1127 = vmatpush1.msra.mxu0 0.0
        %1128 = vmatprep.subr.mxu0 0.0
        %1129 = vmatpush1.msra.mxu0 0.0
        %1130 = vmatprep.subr.mxu0 0.0
        %1131 = vmatpush1.msra.mxu0 0.0
        %1132 = vmatprep.subr.mxu0 0.0
        %1133 = vmatpush1.msra.mxu0 0.0
        %1134 = vmatprep.subr.mxu0 0.0
        %1135 = vmatpush1.msra.mxu0 0.0
        %1136 = vmatprep.subr.mxu0 0.0
        %1137 = vmatpush1.msra.mxu0 0.0
        %1138 = vmatprep.subr.mxu0 0.0
        %1139 = vmatpush1.msra.mxu0 0.0
        %1140 = vmatprep.mubr.f32.mxu0 0.0
        %1141 = vmatmul.mubr.f32.gmra.mrb[0].mxu0 %v1068
        %v1142 = vpop.f32.mrb[0].mxu0
        %v1143 = vadd.f32 0.0, %v1142
        %v1144 = vpop.f32.mrb[0].mxu0
        %1145 = vmatprep.mubr.f32.mxu0 0.0
        %1146 = vmatmul.mubr.f32.gmra.mrb[0].mxu0 %v1069
        %v1147 = vpop.f32.mrb[0].mxu0
        %v1148 = vadd.f32 0.0, %v1147
        %v1149 = vpop.f32.mrb[0].mxu0
        %1150 = vmatprep.mubr.f32.mxu0 0.0
        %1151 = vmatmul.mubr.f32.gmra.mrb[0].mxu0 %v1070
        %v1152 = vpop.f32.mrb[0].mxu0
        %v1153 = vadd.f32 0.0, %v1152
        %v1154 = vpop.f32.mrb[0].mxu0
        %1155 = vmatprep.mubr.f32.mxu0 0.0
        %1156 = vmatmul.mubr.f32.gmra.mrb[0].mxu0 %v1071
        %v1157 = vpop.f32.mrb[0].mxu0
        %v1158 = vadd.f32 0.0, %v1157
        %v1159 = vpop.f32.mrb[0].mxu0
        %1160 = vmatprep.mubr.f32.mxu0 0.0
        %1161 = vmatmul.mubr.f32.gmra.mrb[0].mxu0 %v1072
        %v1162 = vpop.f32.mrb[0].mxu0
        %v1163 = vadd.f32 0.0, %v1162
        %v1164 = vpop.f32.mrb[0].mxu0
        %1165 = vmatprep.mubr.f32.mxu0 0.0
        %1166 = vmatmul.mubr.f32.gmra.mrb[0].mxu0 %v1073
        %v1167 = vpop.f32.mrb[0].mxu0
        %v1168 = vadd.f32 0.0, %v1167
        %v1169 = vpop.f32.mrb[0].mxu0
        %1170 = vmatprep.mubr.f32.mxu0 0.0
        %1171 = vmatmul.mubr.f32.gmra.mrb[0].mxu0 %v1074
        %v1172 = vpop.f32.mrb[0].mxu0
        %v1173 = vadd.f32 0.0, %v1172
        %v1174 = vpop.f32.mrb[0].mxu0
        %1175 = vmatprep.mubr.f32.mxu0 0.0
        %1176 = vmatmul.mubr.f32.gmra.mrb[0].mxu0 %v1075
        %v1177 = vpop.f32.mrb[0].mxu0
        %v1178 = vadd.f32 0.0, %v1177
        %v1179 = vpop.f32.mrb[0].mxu0
        %1180 = vdwg.mxu0
        %v1181 = vsub.f32 %v1068, %v1143
        %v1182 = vsub.f32 %v1069, %v1148
        %v1183 = vsub.f32 %v1070, %v1153
        %v1184 = vsub.f32 %v1071, %v1158
        %v1185 = vsub.f32 %v1072, %v1163
        %v1186 = vsub.f32 %v1073, %v1168
        %v1187 = vsub.f32 %v1074, %v1173
        %v1188 = vsub.f32 %v1075, %v1178
        %v1189 = vmul.f32 %v1181, %v1181
        %v1190 = vmul.f32 %v1182, %v1182
        %v1191 = vmul.f32 %v1183, %v1183
        %v1192 = vmul.f32 %v1184, %v1184
        %v1193 = vmul.f32 %v1185, %v1185
        %v1194 = vmul.f32 %v1186, %v1186
        %v1195 = vmul.f32 %v1187, %v1187
        %v1196 = vmul.f32 %v1188, %v1188
        %1197 = vmatprep.subr.mxu0 0.0
        %1198 = vmatpush1.msra.mxu0 %v482
        %1199 = vmatprep.subr.mxu0 0.0
        %1200 = vmatpush1.msra.mxu0 %v483
        %1201 = vmatprep.subr.mxu0 0.0
        %1202 = vmatpush1.msra.mxu0 %v484
        %1203 = vmatprep.subr.mxu0 0.0
        %1204 = vmatpush1.msra.mxu0 %v485
        %1205 = vmatprep.subr.mxu0 0.0
        %1206 = vmatpush1.msra.mxu0 %v486
        %1207 = vmatprep.subr.mxu0 0.0
        %1208 = vmatpush1.msra.mxu0 %v487
        %1209 = vmatprep.subr.mxu0 0.0
        %1210 = vmatpush1.msra.mxu0 %v488
        %1211 = vmatprep.subr.mxu0 0.0
        %1212 = vmatpush1.msra.mxu0 %v489
        %1213 = vmatprep.subr.mxu0 0.0
        %1214 = vmatpush1.msra.mxu0 %v490
        %1215 = vmatprep.subr.mxu0 0.0
        %1216 = vmatpush1.msra.mxu0 %v491
        %1217 = vmatprep.subr.mxu0 0.0
        %1218 = vmatpush1.msra.mxu0 %v492
        %1219 = vmatprep.subr.mxu0 0.0
        %1220 = vmatpush1.msra.mxu0 %v493
        %1221 = vmatprep.subr.mxu0 0.0
        %1222 = vmatpush1.msra.mxu0 %v494
        %1223 = vmatprep.subr.mxu0 0.0
        %1224 = vmatpush1.msra.mxu0 %v495
        %1225 = vmatprep.subr.mxu0 0.0
        %1226 = vmatpush1.msra.mxu0 %v496
        %1227 = vmatprep.subr.mxu0 0.0
        %1228 = vmatpush1.msra.mxu0 %v497
        %1229 = vmatprep.subr.mxu0 0.0
        %1230 = vmatpush1.msra.mxu0 0.0
        %1231 = vmatprep.subr.mxu0 0.0
        %1232 = vmatpush1.msra.mxu0 0.0
        %1233 = vmatprep.subr.mxu0 0.0
        %1234 = vmatpush1.msra.mxu0 0.0
        %1235 = vmatprep.subr.mxu0 0.0
        %1236 = vmatpush1.msra.mxu0 0.0
        %1237 = vmatprep.subr.mxu0 0.0
        %1238 = vmatpush1.msra.mxu0 0.0
        %1239 = vmatprep.subr.mxu0 0.0
        %1240 = vmatpush1.msra.mxu0 0.0
        %1241 = vmatprep.subr.mxu0 0.0
        %1242 = vmatpush1.msra.mxu0 0.0
        %1243 = vmatprep.subr.mxu0 0.0
        %1244 = vmatpush1.msra.mxu0 0.0
        %1245 = vmatprep.subr.mxu0 0.0
        %1246 = vmatpush1.msra.mxu0 0.0
        %1247 = vmatprep.subr.mxu0 0.0
        %1248 = vmatpush1.msra.mxu0 0.0
        %1249 = vmatprep.subr.mxu0 0.0
        %1250 = vmatpush1.msra.mxu0 0.0
        %1251 = vmatprep.subr.mxu0 0.0
        %1252 = vmatpush1.msra.mxu0 0.0
        %1253 = vmatprep.subr.mxu0 0.0
        %1254 = vmatpush1.msra.mxu0 0.0
        %1255 = vmatprep.subr.mxu0 0.0
        %1256 = vmatpush1.msra.mxu0 0.0
        %1257 = vmatprep.subr.mxu0 0.0
        %1258 = vmatpush1.msra.mxu0 0.0
        %1259 = vmatprep.subr.mxu0 0.0
        %1260 = vmatpush1.msra.mxu0 0.0
        %1261 = vmatprep.mubr.f32.mxu0 0.0
        %1262 = vmatmul.mubr.f32.gmra.mrb[0].mxu0 %v1189
        %v1263 = vpop.f32.mrb[0].mxu0
        %v1264 = vadd.f32 1e-05, %v1263
        %v1265 = vpop.f32.mrb[0].mxu0
        %1266 = vmatprep.mubr.f32.mxu0 0.0
        %1267 = vmatmul.mubr.f32.gmra.mrb[0].mxu0 %v1190
        %v1268 = vpop.f32.mrb[0].mxu0
        %v1269 = vadd.f32 1e-05, %v1268
        %v1270 = vpop.f32.mrb[0].mxu0
        %1271 = vmatprep.mubr.f32.mxu0 0.0
        %1272 = vmatmul.mubr.f32.gmra.mrb[0].mxu0 %v1191
        %v1273 = vpop.f32.mrb[0].mxu0
        %v1274 = vadd.f32 1e-05, %v1273
        %v1275 = vpop.f32.mrb[0].mxu0
        %1276 = vmatprep.mubr.f32.mxu0 0.0
        %1277 = vmatmul.mubr.f32.gmra.mrb[0].mxu0 %v1192
        %v1278 = vpop.f32.mrb[0].mxu0
        %v1279 = vadd.f32 1e-05, %v1278
        %v1280 = vpop.f32.mrb[0].mxu0
        %1281 = vmatprep.mubr.f32.mxu0 0.0
        %1282 = vmatmul.mubr.f32.gmra.mrb[0].mxu0 %v1193
        %v1283 = vpop.f32.mrb[0].mxu0
        %v1284 = vadd.f32 1e-05, %v1283
        %v1285 = vpop.f32.mrb[0].mxu0
        %1286 = vmatprep.mubr.f32.mxu0 0.0
        %1287 = vmatmul.mubr.f32.gmra.mrb[0].mxu0 %v1194
        %v1288 = vpop.f32.mrb[0].mxu0
        %v1289 = vadd.f32 1e-05, %v1288
        %v1290 = vpop.f32.mrb[0].mxu0
        %1291 = vmatprep.mubr.f32.mxu0 0.0
        %1292 = vmatmul.mubr.f32.gmra.mrb[0].mxu0 %v1195
        %v1293 = vpop.f32.mrb[0].mxu0
        %v1294 = vadd.f32 1e-05, %v1293
        %v1295 = vpop.f32.mrb[0].mxu0
        %1296 = vmatprep.mubr.f32.mxu0 0.0
        %1297 = vmatmul.mubr.f32.gmra.mrb[0].mxu0 %v1196
        %v1298 = vpop.f32.mrb[0].mxu0
        %v1299 = vadd.f32 1e-05, %v1298
        %v1300 = vpop.f32.mrb[0].mxu0
        %1301 = vdwg.mxu0
        %v1302 = vrsqrt.pop %v1264
        %v1303 = vrsqrt.pop %v1269
        %v1304 = vrsqrt.pop %v1274
        %v1305 = vrsqrt.pop %v1279
        %v1306 = vrsqrt.pop %v1284
        %v1307 = vrsqrt.pop %v1289
        %v1308 = vrsqrt.pop %v1294
        %v1309 = vrsqrt.pop %v1299
        %v1310 = vmul.f32 %v1181, %v1302
        %v1311 = vmul.f32 %v1182, %v1303
        %v1312 = vmul.f32 %v1183, %v1304
        %v1313 = vmul.f32 %v1184, %v1305
        %v1314 = vmul.f32 %v1185, %v1306
        %v1315 = vmul.f32 %v1186, %v1307
        %v1316 = vmul.f32 %v1187, %v1308
        %v1317 = vmul.f32 %v1188, %v1309
        %v1318 = vld [vmem:[%s5] sm:$0x1]
        %v1320 = vlaneseq
        %v1321 = vshrl.u32 %v1320, 7
        %v1322 = vsub.s32 0, %v1321
        %v1323 = vrot.slane %v1318, %v1322
        %v1325 = vmul.f32 %v1310, %v1323
        %v1326 = vmul.f32 %v1311, %v1323
        %v1327 = vmul.f32 %v1312, %v1323
        %v1328 = vmul.f32 %v1313, %v1323
        %v1329 = vmul.f32 %v1314, %v1323
        %v1330 = vmul.f32 %v1315, %v1323
        %v1331 = vmul.f32 %v1316, %v1323
        %v1332 = vmul.f32 %v1317, %v1323
        %v1333 = vld [vmem:[%s6] sm:$0x1]
        %v1335 = vlaneseq
        %v1336 = vshrl.u32 %v1335, 7
        %v1337 = vsub.s32 0, %v1336
        %v1338 = vrot.slane %v1333, %v1337
        %v1340 = vadd.f32 %v1325, %v1338
        %v1341 = vadd.f32 %v1326, %v1338
        %v1342 = vadd.f32 %v1327, %v1338
        %v1343 = vadd.f32 %v1328, %v1338
        %v1344 = vadd.f32 %v1329, %v1338
        %v1345 = vadd.f32 %v1330, %v1338
        %v1346 = vadd.f32 %v1331, %v1338
        %v1347 = vadd.f32 %v1332, %v1338
        %v1348 = vld [vmem:[#allocation8] sm:$0xff]
        %v1349 = vld [vmem:[#allocation8 + $0x8] sm:$0xff]
        %v1350 = vld [vmem:[#allocation8 + $0x10] sm:$0xff]
        %v1351 = vld [vmem:[#allocation8 + $0x18] sm:$0xff]
        %v1352 = vld [vmem:[#allocation8 + $0x20] sm:$0xff]
        %v1353 = vld [vmem:[#allocation8 + $0x28] sm:$0xff]
        %v1354 = vld [vmem:[#allocation8 + $0x30] sm:$0xff]
        %v1355 = vld [vmem:[#allocation8 + $0x38] sm:$0xff]
        %v1356 = vld [vmem:[#allocation8 + $0x40] sm:$0xff]
        %v1357 = vld [vmem:[#allocation8 + $0x48] sm:$0xff]
        %v1358 = vld [vmem:[#allocation8 + $0x50] sm:$0xff]
        %v1359 = vld [vmem:[#allocation8 + $0x58] sm:$0xff]
        %v1360 = vld [vmem:[#allocation8 + $0x60] sm:$0xff]
        %v1361 = vld [vmem:[#allocation8 + $0x68] sm:$0xff]
        %v1362 = vld [vmem:[#allocation8 + $0x70] sm:$0xff]
        %v1363 = vld [vmem:[#allocation8 + $0x78] sm:$0xff]
        %1364 = vmatprep.subr.mxu0 0.0
        %1365 = vmatpush1.msra.mxu0 %v1348
        %1366 = vmatprep.subr.mxu0 0.0
        %1367 = vmatpush1.msra.mxu0 %v1349
        %1368 = vmatprep.subr.mxu0 0.0
        %1369 = vmatpush1.msra.mxu0 %v1350
        %1370 = vmatprep.subr.mxu0 0.0
        %1371 = vmatpush1.msra.mxu0 %v1351
        %1372 = vmatprep.subr.mxu0 0.0
        %1373 = vmatpush1.msra.mxu0 %v1352
        %1374 = vmatprep.subr.mxu0 0.0
        %1375 = vmatpush1.msra.mxu0 %v1353
        %1376 = vmatprep.subr.mxu0 0.0
        %1377 = vmatpush1.msra.mxu0 %v1354
        %1378 = vmatprep.subr.mxu0 0.0
        %1379 = vmatpush1.msra.mxu0 %v1355
        %1380 = vmatprep.subr.mxu0 0.0
        %1381 = vmatpush1.msra.mxu0 %v1356
        %1382 = vmatprep.subr.mxu0 0.0
        %1383 = vmatpush1.msra.mxu0 %v1357
        %1384 = vmatprep.subr.mxu0 0.0
        %1385 = vmatpush1.msra.mxu0 %v1358
        %1386 = vmatprep.subr.mxu0 0.0
        %1387 = vmatpush1.msra.mxu0 %v1359
        %1388 = vmatprep.subr.mxu0 0.0
        %1389 = vmatpush1.msra.mxu0 %v1360
        %1390 = vmatprep.subr.mxu0 0.0
        %1391 = vmatpush1.msra.mxu0 %v1361
        %1392 = vmatprep.subr.mxu0 0.0
        %1393 = vmatpush1.msra.mxu0 %v1362
        %1394 = vmatprep.subr.mxu0 0.0
        %1395 = vmatpush1.msra.mxu0 %v1363
        %1396 = vmatprep.subr.mxu0 0.0
        %1397 = vmatpush1.msra.mxu0 0.0
        %1398 = vmatprep.subr.mxu0 0.0
        %1399 = vmatpush1.msra.mxu0 0.0
        %1400 = vmatprep.subr.mxu0 0.0
        %1401 = vmatpush1.msra.mxu0 0.0
        %1402 = vmatprep.subr.mxu0 0.0
        %1403 = vmatpush1.msra.mxu0 0.0
        %1404 = vmatprep.subr.mxu0 0.0
        %1405 = vmatpush1.msra.mxu0 0.0
        %1406 = vmatprep.subr.mxu0 0.0
        %1407 = vmatpush1.msra.mxu0 0.0
        %1408 = vmatprep.subr.mxu0 0.0
        %1409 = vmatpush1.msra.mxu0 0.0
        %1410 = vmatprep.subr.mxu0 0.0
        %1411 = vmatpush1.msra.mxu0 0.0
        %1412 = vmatprep.subr.mxu0 0.0
        %1413 = vmatpush1.msra.mxu0 0.0
        %1414 = vmatprep.subr.mxu0 0.0
        %1415 = vmatpush1.msra.mxu0 0.0
        %1416 = vmatprep.subr.mxu0 0.0
        %1417 = vmatpush1.msra.mxu0 0.0
        %1418 = vmatprep.subr.mxu0 0.0
        %1419 = vmatpush1.msra.mxu0 0.0
        %1420 = vmatprep.subr.mxu0 0.0
        %1421 = vmatpush1.msra.mxu0 0.0
        %1422 = vmatprep.subr.mxu0 0.0
        %1423 = vmatpush1.msra.mxu0 0.0
        %1424 = vmatprep.subr.mxu0 0.0
        %1425 = vmatpush1.msra.mxu0 0.0
        %1426 = vmatprep.subr.mxu0 0.0
        %1427 = vmatpush1.msra.mxu0 0.0
        %1428 = vmatprep.mubr.f32.mxu0 0.0
        %1429 = vmatmul.mubr.f32.gmra.mrb[0].mxu0 %v1340
        %v1430 = vpop.f32.mrb[0].mxu0
        %v1431 = vadd.f32 0.0, %v1430
        %v1432 = vpop.f32.mrb[0].mxu0
        %1433 = vmatprep.mubr.f32.mxu0 0.0
        %1434 = vmatmul.mubr.f32.gmra.mrb[0].mxu0 %v1341
        %v1435 = vpop.f32.mrb[0].mxu0
        %v1436 = vadd.f32 0.0, %v1435
        %v1437 = vpop.f32.mrb[0].mxu0
        %1438 = vmatprep.mubr.f32.mxu0 0.0
        %1439 = vmatmul.mubr.f32.gmra.mrb[0].mxu0 %v1342
        %v1440 = vpop.f32.mrb[0].mxu0
        %v1441 = vadd.f32 0.0, %v1440
        %v1442 = vpop.f32.mrb[0].mxu0
        %1443 = vmatprep.mubr.f32.mxu0 0.0
        %1444 = vmatmul.mubr.f32.gmra.mrb[0].mxu0 %v1343
        %v1445 = vpop.f32.mrb[0].mxu0
        %v1446 = vadd.f32 0.0, %v1445
        %v1447 = vpop.f32.mrb[0].mxu0
        %1448 = vmatprep.mubr.f32.mxu0 0.0
        %1449 = vmatmul.mubr.f32.gmra.mrb[0].mxu0 %v1344
        %v1450 = vpop.f32.mrb[0].mxu0
        %v1451 = vadd.f32 0.0, %v1450
        %v1452 = vpop.f32.mrb[0].mxu0
        %1453 = vmatprep.mubr.f32.mxu0 0.0
        %1454 = vmatmul.mubr.f32.gmra.mrb[0].mxu0 %v1345
        %v1455 = vpop.f32.mrb[0].mxu0
        %v1456 = vadd.f32 0.0, %v1455
        %v1457 = vpop.f32.mrb[0].mxu0
        %1458 = vmatprep.mubr.f32.mxu0 0.0
        %1459 = vmatmul.mubr.f32.gmra.mrb[0].mxu0 %v1346
        %v1460 = vpop.f32.mrb[0].mxu0
        %v1461 = vadd.f32 0.0, %v1460
        %v1462 = vpop.f32.mrb[0].mxu0
        %1463 = vmatprep.mubr.f32.mxu0 0.0
        %1464 = vmatmul.mubr.f32.gmra.mrb[0].mxu0 %v1347
        %v1465 = vpop.f32.mrb[0].mxu0
        %v1466 = vadd.f32 0.0, %v1465
        %v1467 = vpop.f32.mrb[0].mxu0
        %1468 = vdwg.mxu0
        %vm1469 = vcmp.ge.f32.partialorder %v1431, 0.0
        %vm1470 = vcmp.ge.f32.partialorder %v1436, 0.0
        %vm1471 = vcmp.ge.f32.partialorder %v1441, 0.0
        %vm1472 = vcmp.ge.f32.partialorder %v1446, 0.0
        %vm1473 = vcmp.ge.f32.partialorder %v1451, 0.0
        %vm1474 = vcmp.ge.f32.partialorder %v1456, 0.0
        %vm1475 = vcmp.ge.f32.partialorder %v1461, 0.0
        %vm1476 = vcmp.ge.f32.partialorder %v1466, 0.0
        %v1477 = vmul.f32 %v1431, 0.01
        %v1478 = vmul.f32 %v1436, 0.01
        %v1479 = vmul.f32 %v1441, 0.01
        %v1480 = vmul.f32 %v1446, 0.01
        %v1481 = vmul.f32 %v1451, 0.01
        %v1482 = vmul.f32 %v1456, 0.01
        %v1483 = vmul.f32 %v1461, 0.01
        %v1484 = vmul.f32 %v1466, 0.01
        %v1485 = vsel %vm1469, %v1431, %v1477
        %v1486 = vsel %vm1470, %v1436, %v1478
        %v1487 = vsel %vm1471, %v1441, %v1479
        %v1488 = vsel %vm1472, %v1446, %v1480
        %v1489 = vsel %vm1473, %v1451, %v1481
        %v1490 = vsel %vm1474, %v1456, %v1482
        %v1491 = vsel %vm1475, %v1461, %v1483
        %v1492 = vsel %vm1476, %v1466, %v1484
        %1493 = vmatprep.subr.mxu0 0.0
        %1494 = vmatpush1.msra.mxu0 %v482
        %1495 = vmatprep.subr.mxu0 0.0
        %1496 = vmatpush1.msra.mxu0 %v483
        %1497 = vmatprep.subr.mxu0 0.0
        %1498 = vmatpush1.msra.mxu0 %v484
        %1499 = vmatprep.subr.mxu0 0.0
        %1500 = vmatpush1.msra.mxu0 %v485
        %1501 = vmatprep.subr.mxu0 0.0
        %1502 = vmatpush1.msra.mxu0 %v486
        %1503 = vmatprep.subr.mxu0 0.0
        %1504 = vmatpush1.msra.mxu0 %v487
        %1505 = vmatprep.subr.mxu0 0.0
        %1506 = vmatpush1.msra.mxu0 %v488
        %1507 = vmatprep.subr.mxu0 0.0
        %1508 = vmatpush1.msra.mxu0 %v489
        %1509 = vmatprep.subr.mxu0 0.0
        %1510 = vmatpush1.msra.mxu0 %v490
        %1511 = vmatprep.subr.mxu0 0.0
        %1512 = vmatpush1.msra.mxu0 %v491
        %1513 = vmatprep.subr.mxu0 0.0
        %1514 = vmatpush1.msra.mxu0 %v492
        %1515 = vmatprep.subr.mxu0 0.0
        %1516 = vmatpush1.msra.mxu0 %v493
        %1517 = vmatprep.subr.mxu0 0.0
        %1518 = vmatpush1.msra.mxu0 %v494
        %1519 = vmatprep.subr.mxu0 0.0
        %1520 = vmatpush1.msra.mxu0 %v495
        %1521 = vmatprep.subr.mxu0 0.0
        %1522 = vmatpush1.msra.mxu0 %v496
        %1523 = vmatprep.subr.mxu0 0.0
        %1524 = vmatpush1.msra.mxu0 %v497
        %1525 = vmatprep.subr.mxu0 0.0
        %1526 = vmatpush1.msra.mxu0 0.0
        %1527 = vmatprep.subr.mxu0 0.0
        %1528 = vmatpush1.msra.mxu0 0.0
        %1529 = vmatprep.subr.mxu0 0.0
        %1530 = vmatpush1.msra.mxu0 0.0
        %1531 = vmatprep.subr.mxu0 0.0
        %1532 = vmatpush1.msra.mxu0 0.0
        %1533 = vmatprep.subr.mxu0 0.0
        %1534 = vmatpush1.msra.mxu0 0.0
        %1535 = vmatprep.subr.mxu0 0.0
        %1536 = vmatpush1.msra.mxu0 0.0
        %1537 = vmatprep.subr.mxu0 0.0
        %1538 = vmatpush1.msra.mxu0 0.0
        %1539 = vmatprep.subr.mxu0 0.0
        %1540 = vmatpush1.msra.mxu0 0.0
        %1541 = vmatprep.subr.mxu0 0.0
        %1542 = vmatpush1.msra.mxu0 0.0
        %1543 = vmatprep.subr.mxu0 0.0
        %1544 = vmatpush1.msra.mxu0 0.0
        %1545 = vmatprep.subr.mxu0 0.0
        %1546 = vmatpush1.msra.mxu0 0.0
        %1547 = vmatprep.subr.mxu0 0.0
        %1548 = vmatpush1.msra.mxu0 0.0
        %1549 = vmatprep.subr.mxu0 0.0
        %1550 = vmatpush1.msra.mxu0 0.0
        %1551 = vmatprep.subr.mxu0 0.0
        %1552 = vmatpush1.msra.mxu0 0.0
        %1553 = vmatprep.subr.mxu0 0.0
        %1554 = vmatpush1.msra.mxu0 0.0
        %1555 = vmatprep.subr.mxu0 0.0
        %1556 = vmatpush1.msra.mxu0 0.0
        %1557 = vmatprep.mubr.f32.mxu0 0.0
        %1558 = vmatmul.mubr.f32.gmra.mrb[0].mxu0 %v1485
        %v1559 = vpop.f32.mrb[0].mxu0
        %v1560 = vadd.f32 0.0, %v1559
        %v1561 = vpop.f32.mrb[0].mxu0
        %1562 = vmatprep.mubr.f32.mxu0 0.0
        %1563 = vmatmul.mubr.f32.gmra.mrb[0].mxu0 %v1486
        %v1564 = vpop.f32.mrb[0].mxu0
        %v1565 = vadd.f32 0.0, %v1564
        %v1566 = vpop.f32.mrb[0].mxu0
        %1567 = vmatprep.mubr.f32.mxu0 0.0
        %1568 = vmatmul.mubr.f32.gmra.mrb[0].mxu0 %v1487
        %v1569 = vpop.f32.mrb[0].mxu0
        %v1570 = vadd.f32 0.0, %v1569
        %v1571 = vpop.f32.mrb[0].mxu0
        %1572 = vmatprep.mubr.f32.mxu0 0.0
        %1573 = vmatmul.mubr.f32.gmra.mrb[0].mxu0 %v1488
        %v1574 = vpop.f32.mrb[0].mxu0
        %v1575 = vadd.f32 0.0, %v1574
        %v1576 = vpop.f32.mrb[0].mxu0
        %1577 = vmatprep.mubr.f32.mxu0 0.0
        %1578 = vmatmul.mubr.f32.gmra.mrb[0].mxu0 %v1489
        %v1579 = vpop.f32.mrb[0].mxu0
        %v1580 = vadd.f32 0.0, %v1579
        %v1581 = vpop.f32.mrb[0].mxu0
        %1582 = vmatprep.mubr.f32.mxu0 0.0
        %1583 = vmatmul.mubr.f32.gmra.mrb[0].mxu0 %v1490
        %v1584 = vpop.f32.mrb[0].mxu0
        %v1585 = vadd.f32 0.0, %v1584
        %v1586 = vpop.f32.mrb[0].mxu0
        %1587 = vmatprep.mubr.f32.mxu0 0.0
        %1588 = vmatmul.mubr.f32.gmra.mrb[0].mxu0 %v1491
        %v1589 = vpop.f32.mrb[0].mxu0
        %v1590 = vadd.f32 0.0, %v1589
        %v1591 = vpop.f32.mrb[0].mxu0
        %1592 = vmatprep.mubr.f32.mxu0 0.0
        %1593 = vmatmul.mubr.f32.gmra.mrb[0].mxu0 %v1492
        %v1594 = vpop.f32.mrb[0].mxu0
        %v1595 = vadd.f32 0.0, %v1594
        %v1596 = vpop.f32.mrb[0].mxu0
        %1597 = vdwg.mxu0
        %v1598 = vsub.f32 %v1485, %v1560
        %v1599 = vsub.f32 %v1486, %v1565
        %v1600 = vsub.f32 %v1487, %v1570
        %v1601 = vsub.f32 %v1488, %v1575
        %v1602 = vsub.f32 %v1489, %v1580
        %v1603 = vsub.f32 %v1490, %v1585
        %v1604 = vsub.f32 %v1491, %v1590
        %v1605 = vsub.f32 %v1492, %v1595
        %v1606 = vmul.f32 %v1598, %v1598
        %v1607 = vmul.f32 %v1599, %v1599
        %v1608 = vmul.f32 %v1600, %v1600
        %v1609 = vmul.f32 %v1601, %v1601
        %v1610 = vmul.f32 %v1602, %v1602
        %v1611 = vmul.f32 %v1603, %v1603
        %v1612 = vmul.f32 %v1604, %v1604
        %v1613 = vmul.f32 %v1605, %v1605
        %1614 = vmatprep.subr.mxu0 0.0
        %1615 = vmatpush1.msra.mxu0 %v482
        %1616 = vmatprep.subr.mxu0 0.0
        %1617 = vmatpush1.msra.mxu0 %v483
        %1618 = vmatprep.subr.mxu0 0.0
        %1619 = vmatpush1.msra.mxu0 %v484
        %1620 = vmatprep.subr.mxu0 0.0
        %1621 = vmatpush1.msra.mxu0 %v485
        %1622 = vmatprep.subr.mxu0 0.0
        %1623 = vmatpush1.msra.mxu0 %v486
        %1624 = vmatprep.subr.mxu0 0.0
        %1625 = vmatpush1.msra.mxu0 %v487
        %1626 = vmatprep.subr.mxu0 0.0
        %1627 = vmatpush1.msra.mxu0 %v488
        %1628 = vmatprep.subr.mxu0 0.0
        %1629 = vmatpush1.msra.mxu0 %v489
        %1630 = vmatprep.subr.mxu0 0.0
        %1631 = vmatpush1.msra.mxu0 %v490
        %1632 = vmatprep.subr.mxu0 0.0
        %1633 = vmatpush1.msra.mxu0 %v491
        %1634 = vmatprep.subr.mxu0 0.0
        %1635 = vmatpush1.msra.mxu0 %v492
        %1636 = vmatprep.subr.mxu0 0.0
        %1637 = vmatpush1.msra.mxu0 %v493
        %1638 = vmatprep.subr.mxu0 0.0
        %1639 = vmatpush1.msra.mxu0 %v494
        %1640 = vmatprep.subr.mxu0 0.0
        %1641 = vmatpush1.msra.mxu0 %v495
        %1642 = vmatprep.subr.mxu0 0.0
        %1643 = vmatpush1.msra.mxu0 %v496
        %1644 = vmatprep.subr.mxu0 0.0
        %1645 = vmatpush1.msra.mxu0 %v497
        %1646 = vmatprep.subr.mxu0 0.0
        %1647 = vmatpush1.msra.mxu0 0.0
        %1648 = vmatprep.subr.mxu0 0.0
        %1649 = vmatpush1.msra.mxu0 0.0
        %1650 = vmatprep.subr.mxu0 0.0
        %1651 = vmatpush1.msra.mxu0 0.0
        %1652 = vmatprep.subr.mxu0 0.0
        %1653 = vmatpush1.msra.mxu0 0.0
        %1654 = vmatprep.subr.mxu0 0.0
        %1655 = vmatpush1.msra.mxu0 0.0
        %1656 = vmatprep.subr.mxu0 0.0
        %1657 = vmatpush1.msra.mxu0 0.0
        %1658 = vmatprep.subr.mxu0 0.0
        %1659 = vmatpush1.msra.mxu0 0.0
        %1660 = vmatprep.subr.mxu0 0.0
        %1661 = vmatpush1.msra.mxu0 0.0
        %1662 = vmatprep.subr.mxu0 0.0
        %1663 = vmatpush1.msra.mxu0 0.0
        %1664 = vmatprep.subr.mxu0 0.0
        %1665 = vmatpush1.msra.mxu0 0.0
        %1666 = vmatprep.subr.mxu0 0.0
        %1667 = vmatpush1.msra.mxu0 0.0
        %1668 = vmatprep.subr.mxu0 0.0
        %1669 = vmatpush1.msra.mxu0 0.0
        %1670 = vmatprep.subr.mxu0 0.0
        %1671 = vmatpush1.msra.mxu0 0.0
        %1672 = vmatprep.subr.mxu0 0.0
        %1673 = vmatpush1.msra.mxu0 0.0
        %1674 = vmatprep.subr.mxu0 0.0
        %1675 = vmatpush1.msra.mxu0 0.0
        %1676 = vmatprep.subr.mxu0 0.0
        %1677 = vmatpush1.msra.mxu0 0.0
        %1678 = vmatprep.mubr.f32.mxu0 0.0
        %1679 = vmatmul.mubr.f32.gmra.mrb[0].mxu0 %v1606
        %v1680 = vpop.f32.mrb[0].mxu0
        %v1681 = vadd.f32 1e-05, %v1680
        %v1682 = vpop.f32.mrb[0].mxu0
        %1683 = vmatprep.mubr.f32.mxu0 0.0
        %1684 = vmatmul.mubr.f32.gmra.mrb[0].mxu0 %v1607
        %v1685 = vpop.f32.mrb[0].mxu0
        %v1686 = vadd.f32 1e-05, %v1685
        %v1687 = vpop.f32.mrb[0].mxu0
        %1688 = vmatprep.mubr.f32.mxu0 0.0
        %1689 = vmatmul.mubr.f32.gmra.mrb[0].mxu0 %v1608
        %v1690 = vpop.f32.mrb[0].mxu0
        %v1691 = vadd.f32 1e-05, %v1690
        %v1692 = vpop.f32.mrb[0].mxu0
        %1693 = vmatprep.mubr.f32.mxu0 0.0
        %1694 = vmatmul.mubr.f32.gmra.mrb[0].mxu0 %v1609
        %v1695 = vpop.f32.mrb[0].mxu0
        %v1696 = vadd.f32 1e-05, %v1695
        %v1697 = vpop.f32.mrb[0].mxu0
        %1698 = vmatprep.mubr.f32.mxu0 0.0
        %1699 = vmatmul.mubr.f32.gmra.mrb[0].mxu0 %v1610
        %v1700 = vpop.f32.mrb[0].mxu0
        %v1701 = vadd.f32 1e-05, %v1700
        %v1702 = vpop.f32.mrb[0].mxu0
        %1703 = vmatprep.mubr.f32.mxu0 0.0
        %1704 = vmatmul.mubr.f32.gmra.mrb[0].mxu0 %v1611
        %v1705 = vpop.f32.mrb[0].mxu0
        %v1706 = vadd.f32 1e-05, %v1705
        %v1707 = vpop.f32.mrb[0].mxu0
        %1708 = vmatprep.mubr.f32.mxu0 0.0
        %1709 = vmatmul.mubr.f32.gmra.mrb[0].mxu0 %v1612
        %v1710 = vpop.f32.mrb[0].mxu0
        %v1711 = vadd.f32 1e-05, %v1710
        %v1712 = vpop.f32.mrb[0].mxu0
        %1713 = vmatprep.mubr.f32.mxu0 0.0
        %1714 = vmatmul.mubr.f32.gmra.mrb[0].mxu0 %v1613
        %v1715 = vpop.f32.mrb[0].mxu0
        %v1716 = vadd.f32 1e-05, %v1715
        %v1717 = vpop.f32.mrb[0].mxu0
        %1718 = vdwg.mxu0
        %v1719 = vrsqrt.pop %v1681
        %v1720 = vrsqrt.pop %v1686
        %v1721 = vrsqrt.pop %v1691
        %v1722 = vrsqrt.pop %v1696
        %v1723 = vrsqrt.pop %v1701
        %v1724 = vrsqrt.pop %v1706
        %v1725 = vrsqrt.pop %v1711
        %v1726 = vrsqrt.pop %v1716
        %v1727 = vmul.f32 %v1598, %v1719
        %v1728 = vmul.f32 %v1599, %v1720
        %v1729 = vmul.f32 %v1600, %v1721
        %v1730 = vmul.f32 %v1601, %v1722
        %v1731 = vmul.f32 %v1602, %v1723
        %v1732 = vmul.f32 %v1603, %v1724
        %v1733 = vmul.f32 %v1604, %v1725
        %v1734 = vmul.f32 %v1605, %v1726
        %v1735 = vld [vmem:[%s8] sm:$0x1]
        %v1737 = vlaneseq
        %v1738 = vshrl.u32 %v1737, 7
        %v1739 = vsub.s32 0, %v1738
        %v1740 = vrot.slane %v1735, %v1739
        %v1742 = vmul.f32 %v1727, %v1740
        %v1743 = vmul.f32 %v1728, %v1740
        %v1744 = vmul.f32 %v1729, %v1740
        %v1745 = vmul.f32 %v1730, %v1740
        %v1746 = vmul.f32 %v1731, %v1740
        %v1747 = vmul.f32 %v1732, %v1740
        %v1748 = vmul.f32 %v1733, %v1740
        %v1749 = vmul.f32 %v1734, %v1740
        %v1750 = vld [vmem:[%s9] sm:$0x1]
        %v1752 = vlaneseq
        %v1753 = vshrl.u32 %v1752, 7
        %v1754 = vsub.s32 0, %v1753
        %v1755 = vrot.slane %v1750, %v1754
        %v1757 = vadd.f32 %v1742, %v1755
        %v1758 = vadd.f32 %v1743, %v1755
        %v1759 = vadd.f32 %v1744, %v1755
        %v1760 = vadd.f32 %v1745, %v1755
        %v1761 = vadd.f32 %v1746, %v1755
        %v1762 = vadd.f32 %v1747, %v1755
        %v1763 = vadd.f32 %v1748, %v1755
        %v1764 = vadd.f32 %v1749, %v1755
        %1765 = vst [vmem:[%s463] sm:$0xff] %v1757
        %1766 = vst [vmem:[%s463 + $0x8] sm:$0xff] %v1758
        %1767 = vst [vmem:[%s463 + $0x10] sm:$0xff] %v1759
        %1768 = vst [vmem:[%s463 + $0x18] sm:$0xff] %v1760
        %1769 = vst [vmem:[%s463 + $0x20] sm:$0xff] %v1761
        %1770 = vst [vmem:[%s463 + $0x28] sm:$0xff] %v1762
        %1771 = vst [vmem:[%s463 + $0x30] sm:$0xff] %v1763
        %1772 = vst [vmem:[%s463 + $0x38] sm:$0xff] %v1764
        %s1773 = sand.u32 %s274, 1
        %s1774 = scalar_lea.sflag [#allocation4], %s1773
        %s1775 = sand.u32 %s274, 1
        %s1776 = smul.addr %s1775, 64
        %s1777 = scalar_lea.vmem [#allocation11], %s1776
        // Predicated region
        $region85: #{tpu_custom_call.1} parent=63 // pred_check
          %p1778 = pneg %p284
        $region86: #{tpu_custom_call.1} parent=63 // pred_check_branch
          %1780 = sbr.rel (%p1778) target = $region88
        $region87: #{tpu_custom_call.1} parent=63 // pred_region
          %s1781 = smul.u32 8, %s30
          %s1783 = ssub.s32 1024, 1024
          %1784 = vsyncadd %s1774, %s1783
          %s1785 = smul.addr %s1781, 128
          %s1786 = scalar_lea.hbm %s11, %s1785
          %s1787 = sshll.u32 %s1777, 4
          %s1788 = int_to_ptr.vmem [resolvable:$true] %s1787
          %1793 = dma.vmem_to_hbm [thread:$0]  %s1788, 1024, %s1786, %s1774, 128, 128, 8
        $region88: #{tpu_custom_call.1} parent=63 // pred_fallthru
          _
      $region64: #{tpu_custom_call.1} parent=5 // pred_fallthru
        _
      %p1794 = scmp.le.s32.totalorder 2, %s25
      // Predicated region
      $region89: #{tpu_custom_call.1} parent=5 // pred_check
        %p1795 = pneg %p1794
      $region90: #{tpu_custom_call.1} parent=5 // pred_check_branch
        %1797 = sbr.rel (%p1795) target = $region92
      $region91: #{tpu_custom_call.1} parent=5 // pred_region
        %s1798 = ssub.s32 %s25, 2
        // Predicated region
        $region93: #{tpu_custom_call.1} parent=91 // pred_check
          %p1799 = pneg %p290
        $region94: #{tpu_custom_call.1} parent=91 // pred_check_branch
          %1801 = sbr.rel (%p1799) target = $region96
        $region95: #{tpu_custom_call.1} parent=91 // pred_region
          %s1802 = sand.u32 %s275, 1
          %s1803 = scalar_lea.sflag [#allocation4], %s1802
          %s1804 = sand.u32 %s275, 1
          %s1805 = smul.addr %s1804, 64
          %s1806 = scalar_lea.vmem [#allocation11], %s1805
          %1807 = dma.done %s1803, 1024
        $region96: #{tpu_custom_call.1} parent=91 // pred_fallthru
          _
      $region92: #{tpu_custom_call.1} parent=5 // pred_fallthru
        _
    $region6: #{tpu_custom_call.1} parent=1 // loop_footer
      %s29 = sadd.s32 1, %s25
    $region7: #{tpu_custom_call.1} parent=1 // loop_footer_branch
      %24 = sbr.rel target = $region3
    $region8: #{tpu_custom_call.1} parent=1 // loop_exit
      _
    %1808 = vsyncpa [#allocation3], 1
    %s1809 = scalar_lea.sflag [#allocation3], 1
    %1810 = vsyncpa %s1809, 1
    %1811 = vsyncpa [#allocation6], 1
    %1812 = vsyncpa [#allocation9], 1
    %1813 = vsyncpa [#allocation4], 1
    %s1814 = scalar_lea.sflag [#allocation4], 1
    %1815 = vsyncpa %s1814, 1

</llo_original>
